<compile_context>
chip_gen: v6e
topology: v6e:2x2x1
jax: 0.10.0
libtpu: 0.0.40
codegen_flags: <defaults>
</compile_context>

<pallas_src>
import math
import numpy as np
import jax
import jax.numpy as jnp
from jax.experimental import pallas as pl
from jax.experimental.pallas import tpu as pltpu


def _round_up(a, b):
    return ((a + b - 1) // b) * b


def _make_kernel(n_taps, tap_step, tl, coutp, has_cond):
    """Build the fused gated-activation kernel for one (batch, time-tile) grid cell.

    Refs (cond variant):  x (1,1,R,S), cond (1,Cc_p,TL), w (n_taps,2*Coutp,R),
                          wc (2*Coutp,Cc_p), bias (2*Coutp,1), out (1,Coutp,TL)
    """

    def kernel(*refs):
        if has_cond:
            x_ref, c_ref, w_ref, wc_ref, b_ref, o_ref = refs
        else:
            x_ref, w_ref, b_ref, o_ref = refs
            c_ref = wc_ref = None

        # Tap 0 (static slices; taps fully unrolled — n_taps is a Python int).
        acc = jnp.dot(w_ref[0], x_ref[0, 0, :, 0:tl],
                      preferred_element_type=jnp.float32)          # (2*Coutp, TL) f32
        for k in range(1, n_taps):
            acc = acc + jnp.dot(
                w_ref[k], x_ref[0, 0, :, k * tap_step:k * tap_step + tl],
                preferred_element_type=jnp.float32)

        if has_cond:  # kernel-size-1 conditioning conv fused as one more MXU pass
            acc = acc + jnp.dot(wc_ref[...], c_ref[0],
                                preferred_element_type=jnp.float32)

        acc = acc + b_ref[...]                                      # lane-broadcast bias

        # f/g halves split on an 8-sublane (f32) tile boundary -> free slice.
        # TODO(synk): for very large Cout*TL, chunk this epilogue over lane slabs to
        # cap the f32 intermediate footprint; negligible at these sizes.
        f = acc[:coutp]
        g = acc[coutp:]
        o_ref[0] = (jnp.tanh(f) * jax.nn.sigmoid(g)).astype(o_ref.dtype)

    return kernel


def conditional_gau(x, condition, W, b, Wc, bc, *, stride=1, padding=0, dilation=1,
                    compute_dtype=jnp.bfloat16, time_tile=512, out_dtype=None):
    """Forward pass matching the PyTorch module (groups=1, bias=True).

    x:         (N, Cin,   L)
    condition: (N, Ccond, Lc) or None  (narrowed to the last L_out steps; the module
               is only shape-consistent for stride=1 / padding=0 on the cond path)
    W:         (2*Cout, Cin, K)    Wc: (2*Cout, Ccond, 1)
    b, bc:     (2*Cout,)
    returns:   (N, Cout, L_out)
    """
    N, Cin, L = x.shape
    two_cout, _, K = W.shape
    Cout = two_cout // 2
    out_dtype = x.dtype if out_dtype is None else out_dtype   # pass bf16 to halve writes (v6e/v7x)
    has_cond = condition is not None

    # ---- conv geometry --------------------------------------------------------
    if padding > 0:
        x = jnp.pad(x, ((0, 0), (0, 0), (padding, padding)))
    Lp = x.shape[2]
    Lout = (Lp - dilation * (K - 1) - 1) // stride + 1
    assert Lout >= 1, "input too short for this kernel_size/dilation/stride"

    # ---- time tiling: L' rides the lane axis ----------------------------------
    if Lout <= time_tile:
        TL, T = Lout, 1                               # full-dim block: no lane padding
    else:
        TL = max(128, (time_tile // 128) * 128)       # lane-dense (unmasked) stores
        T = -(-Lout // TL)

    # ---- sublane alignment (channels ride the sublane axis) -------------------
    itemsize = jnp.dtype(compute_dtype).itemsize
    sub = max(8, 32 // max(itemsize, 1))              # 8 (f32) / 16 (bf16) / 32 (8-bit)
    Coutp = _round_up(Cout, 8)                        # f32 accumulator: halves slice on 8-row tiles
    two_coutp = 2 * Coutp

    # ---- streamed x slabs ------------------------------------------------------
    if stride == 1:
        # Fast path: raw x windows (tile + halo); taps accumulated in-kernel.
        K_eff, Cin_eff, tap_step = K, Cin, dilation
    else:
        # TODO(synk): strided taps would need strided lane slices in-kernel; fuse the
        # taps in glue instead (K x input inflation) for stride > 1.
        K_eff, Cin_eff, tap_step = 1, Cin * K, 0
    R = _round_up(Cin_eff, sub)                       # slab sublane rows (contraction dim)
    S = TL + (K_eff - 1) * tap_step                   # slab lane length

    Lneed = (T * TL - 1) * stride + (K - 1) * dilation + 1
    if Lneed > Lp:
        x = jnp.pad(x, ((0, 0), (0, 0), (0, Lneed - Lp)))

    if stride == 1:
        gidx = jnp.arange(T)[:, None] * TL + jnp.arange(S)[None, :]              # (T, S)
        x_ov = jnp.moveaxis(x[:, :, gidx], 1, 2)                                  # (N, T, Cin, S)
    else:
        offs = jnp.arange(K)[:, None] * dilation + jnp.arange(TL)[None, :] * stride
        gidx = (jnp.arange(T) * (TL * stride))[:, None, None] + offs[None]        # (T, K, TL)
        x_ov = jnp.moveaxis(x[:, :, gidx], 1, 3).reshape(N, T, K * Cin, TL)       # rows = (k, cin)
    x_ov = jnp.pad(x_ov, ((0, 0), (0, 0), (0, R - Cin_eff), (0, 0))).astype(compute_dtype)

    # ---- weights: fuse [Wf ; Wg] into one resident (K_eff, 2*Coutp, R) array ----
    def _pad_halves(w):  # (2*Cout, ...) -> (2*Coutp, ...), f/g halves padded separately
        pad = [(0, Coutp - Cout)] + [(0, 0)] * (w.ndim - 1)
        return jnp.concatenate([jnp.pad(w[:Cout], pad), jnp.pad(w[Cout:], pad)], axis=0)

    Wk = W.transpose(0, 2, 1).reshape(two_cout, K_eff, Cin_eff)   # (oc, tap, cin-group)
    Wk = jnp.pad(Wk, ((0, 0), (0, 0), (0, R - Cin_eff)))
    Wk = _pad_halves(Wk).transpose(1, 0, 2).astype(compute_dtype)  # (K_eff, 2*Coutp, R)

    bias = b
    if has_cond:
        Ccond, Lc = condition.shape[1], condition.shape[2]
        assert Lc >= Lout, "condition must cover at least L_out time steps"
        Cc_p = _round_up(Ccond, sub)
        cond_n = condition[:, :, Lc - Lout:]                       # narrow to last L_out steps
        cond_p = jnp.pad(cond_n, ((0, 0), (0, Cc_p - Ccond), (0, T * TL - Lout)))
        cond_p = cond_p.astype(compute_dtype)
        Wc_p = _pad_halves(jnp.pad(Wc.reshape(two_cout, Ccond),
                                   ((0, 0), (0, Cc_p - Ccond)))).astype(compute_dtype)
        bias = b + bc                                              # biases of both convs fold in
    b_p = _pad_halves(bias.reshape(two_cout, 1)).astype(jnp.float32)  # (2*Coutp, 1)

    # ---- explicit VMEM accounting -> scoped limit (v7x: 64 MiB physical) -------
    est = (2 * R * S * itemsize                                   # x slab, double-buffered
           + 2 * Coutp * TL * jnp.dtype(out_dtype).itemsize       # out tile, double-buffered
           + K_eff * two_coutp * R * itemsize + two_coutp * 4     # resident weights + bias
           + 3 * two_coutp * TL * 4)                              # f32 acc / gate intermediates
    if has_cond:
        est += 2 * Cc_p * TL * itemsize + two_coutp * Cc_p * itemsize
    vmem_limit = int(min(max(32 << 20, 2 * est), 64 << 20))

    kernel = _make_kernel(K_eff, tap_step, TL, Coutp, has_cond)

    def _build(single_buffer_weights):
        # Grid-invariant operands never change -> single-buffer them when supported.
        res = {"pipeline_mode": pl.Buffered(1)} if single_buffer_weights else {}
        in_specs = [pl.BlockSpec((1, 1, R, S), lambda n, t: (n, t, 0, 0))]          # streamed slabs
        if has_cond:
            in_specs.append(pl.BlockSpec((1, Cc_p, TL), lambda n, t: (n, 0, t)))    # streamed cond
        in_specs.append(pl.BlockSpec((K_eff, two_coutp, R), lambda n, t: (0, 0, 0), **res))
        if has_cond:
            in_specs.append(pl.BlockSpec((two_coutp, Cc_p), lambda n, t: (0, 0), **res))
        in_specs.append(pl.BlockSpec((two_coutp, 1), lambda n, t: (0, 0), **res))
        return pl.pallas_call(
            kernel,
            out_shape=jax.ShapeDtypeStruct((N, Coutp, T * TL), out_dtype),
            grid_spec=pltpu.PrefetchScalarGridSpec(
                num_scalar_prefetch=0,
                grid=(N, T),
                in_specs=in_specs,
                out_specs=pl.BlockSpec((1, Coutp, TL), lambda n, t: (n, 0, t)),
            ),
            compiler_params=pltpu.CompilerParams(
                dimension_semantics=("parallel", "parallel"),
                vmem_limit_bytes=vmem_limit),
        )

    operands = ([x_ov] + ([cond_p] if has_cond else []) + [Wk]
                + ([Wc_p] if has_cond else []) + [b_p])
    try:
        out = _build(True)(*operands)
    except Exception:  # pragma: no cover — jax without BlockSpec.pipeline_mode / Buffered(1)
        out = _build(False)(*operands)

    # Already (N, Cout_p, L'_p): just strip the padding — no transpose needed.
    return out[:, :Cout, :Lout]


def _ref_forward(x, condition, W, b, Wc, bc, *, stride=1, padding=0, dilation=1):
    """Pure-JAX reference (lax conv), mirrors the PyTorch forward."""
    Cout = W.shape[0] // 2
    y = jax.lax.conv_general_dilated(
        x, W, window_strides=(stride,), padding=[(padding, padding)],
        rhs_dilation=(dilation,), dimension_numbers=("NCH", "OIH", "NCH"))
    y = y + b[None, :, None]
    Lout = y.shape[2]
    if condition is not None:
        cond_n = condition[:, :, condition.shape[2] - Lout:]
        yc = jax.lax.conv_general_dilated(
            cond_n, Wc, window_strides=(stride,), padding=[(padding, padding)],
            dimension_numbers=("NCH", "OIH", "NCH"))
        y = y + yc + bc[None, :, None]
    f = y[:, :Cout]
    g = y[:, Cout:]
    return jnp.tanh(f) * jax.nn.sigmoid(g)


if __name__ == "__main__":
    # Small shapes consistent with the module's forward:
    #   x: (N=2, in_channels=4, L=16), condition: (N=2, cond_channels=3, L=16)
    N, Cin, Ccond, Cout, K, L = 2, 4, 3, 8, 3, 16
    stride, padding, dilation = 1, 0, 2

    key = jax.random.PRNGKey(0)
    kx, kc, kw, kb, kwc, kbc = jax.random.split(key, 6)

    x = jax.random.normal(kx, (N, Cin, L), dtype=jnp.float32)
    condition = jax.random.normal(kc, (N, Ccond, L), dtype=jnp.float32)

    # Deterministic parameter init (uniform +-1/sqrt(fan_in), PyTorch-like bounds)
    bound_w = 1.0 / math.sqrt(Cin * K)
    W = jax.random.uniform(kw, (2 * Cout, Cin, K), minval=-bound_w, maxval=bound_w,
                           dtype=jnp.float32)
    b = jax.random.uniform(kb, (2 * Cout,), minval=-bound_w, maxval=bound_w,
                           dtype=jnp.float32)
    bound_wc = 1.0 / math.sqrt(Ccond * 1)
    Wc = jax.random.uniform(kwc, (2 * Cout, Ccond, 1), minval=-bound_wc, maxval=bound_wc,
                            dtype=jnp.float32)
    bc = jax.random.uniform(kbc, (2 * Cout,), minval=-bound_wc, maxval=bound_wc,
                            dtype=jnp.float32)

    ref = jax.block_until_ready(
        _ref_forward(x, condition, W, b, Wc, bc,
                     stride=stride, padding=padding, dilation=dilation))

    # f32 MXU path (fast in-kernel-tap path): tight tolerance
    out_f32 = jax.block_until_ready(
        conditional_gau(x, condition, W, b, Wc, bc,
                        stride=stride, padding=padding, dilation=dilation,
                        compute_dtype=jnp.float32))
    assert out_f32.shape == ref.shape, (out_f32.shape, ref.shape)
    np.testing.assert_allclose(np.asarray(out_f32), np.asarray(ref),
                               rtol=1e-4, atol=1e-4)

    # bf16 MXU inputs / f32 accumulation: relaxed tolerance
    out_bf16 = jax.block_until_ready(
        conditional_gau(x, condition, W, b, Wc, bc,
                        stride=stride, padding=padding, dilation=dilation,
                        compute_dtype=jnp.bfloat16))
    np.testing.assert_allclose(np.asarray(out_bf16), np.asarray(ref),
                               rtol=2e-2, atol=2e-2)

    # Unconditional + strided/padded conv: exercises the glue-fused-tap fallback path.
    ref_nc = jax.block_until_ready(
        _ref_forward(x, None, W, b, Wc, bc, stride=2, padding=1, dilation=dilation))
    out_nc = jax.block_until_ready(
        conditional_gau(x, None, W, b, Wc, bc, stride=2, padding=1, dilation=dilation,
                        compute_dtype=jnp.float32))
    np.testing.assert_allclose(np.asarray(out_nc), np.asarray(ref_nc),
                               rtol=1e-4, atol=1e-4)

    print("KERNEL_OK")
</pallas_src>

<mosaic_0001>
module attributes {stable_mosaic.version = 11 : i64} {
  func.func @kernel(%arg0: i32, %arg1: i32, %arg2: memref<1x1x8x16xf32, #tpu.memory_space<vmem>>, %arg3: memref<1x8x12xf32, #tpu.memory_space<vmem>>, %arg4: memref<3x16x8xf32, #tpu.memory_space<vmem>>, %arg5: memref<16x8xf32, #tpu.memory_space<vmem>>, %arg6: memref<16x1xf32, #tpu.memory_space<vmem>>, %arg7: memref<1x8x12xf32, #tpu.memory_space<vmem>>) attributes {dimension_semantics = [#tpu.dimension_semantics<parallel>, #tpu.dimension_semantics<parallel>], iteration_bounds = array<i64: 2, 1>, scalar_prefetch = 0 : i64, scratch_operands = 0 : i64, tpu.core_type = #tpu.core_type<tc>, window_params = [{transform_indices = @transform_0, window_bounds = array<i64: 1, 1, 8, 16>}, {transform_indices = @transform_1, window_bounds = array<i64: 1, 8, 12>}, {pipeline_mode = #tpu.pipeline_mode<synchronous>, transform_indices = @transform_2, window_bounds = array<i64: 3, 16, 8>}, {pipeline_mode = #tpu.pipeline_mode<synchronous>, transform_indices = @transform_3, window_bounds = array<i64: 16, 8>}, {pipeline_mode = #tpu.pipeline_mode<synchronous>, transform_indices = @transform_4, window_bounds = array<i64: 16, 1>}, {transform_indices = @transform_5, window_bounds = array<i64: 1, 8, 12>}]} {
    %c0 = arith.constant 0 : index
    %c0_0 = arith.constant 0 : index
    %c0_1 = arith.constant 0 : index
    %0 = vector.load %arg4[%c0, %c0_0, %c0_1] : memref<3x16x8xf32, #tpu.memory_space<vmem>>, vector<1x16x8xf32>
    %1 = vector.shape_cast %0 : vector<1x16x8xf32> to vector<16x8xf32>
    %c0_2 = arith.constant 0 : index
    %c0_3 = arith.constant 0 : index
    %c0_4 = arith.constant 0 : index
    %c0_5 = arith.constant 0 : index
    %2 = vector.load %arg2[%c0_2, %c0_3, %c0_4, %c0_5] : memref<1x1x8x16xf32, #tpu.memory_space<vmem>>, vector<1x1x8x12xf32>
    %3 = vector.shape_cast %2 : vector<1x1x8x12xf32> to vector<8x12xf32>
    %cst = arith.constant dense<0.000000e+00> : vector<16x12xf32>
    %4 = tpu.matmul %1, %3, %cst {dimension_numbers = #tpu.dot_dimension_numbers<[1], [0], [0], [1], [0, 0, 1, 1], [], []>} : vector<16x8xf32>, vector<8x12xf32>, vector<16x12xf32> -> vector<16x12xf32>
    %c1 = arith.constant 1 : index
    %c0_6 = arith.constant 0 : index
    %c0_7 = arith.constant 0 : index
    %5 = vector.load %arg4[%c1, %c0_6, %c0_7] : memref<3x16x8xf32, #tpu.memory_space<vmem>>, vector<1x16x8xf32>
    %6 = vector.shape_cast %5 : vector<1x16x8xf32> to vector<16x8xf32>
    %c0_8 = arith.constant 0 : index
    %c0_9 = arith.constant 0 : index
    %c0_10 = arith.constant 0 : index
    %c2 = arith.constant 2 : index
    %7 = vector.load %arg2[%c0_8, %c0_9, %c0_10, %c2] : memref<1x1x8x16xf32, #tpu.memory_space<vmem>>, vector<1x1x8x12xf32>
    %8 = vector.shape_cast %7 : vector<1x1x8x12xf32> to vector<8x12xf32>
    %cst_11 = arith.constant dense<0.000000e+00> : vector<16x12xf32>
    %9 = tpu.matmul %6, %8, %cst_11 {dimension_numbers = #tpu.dot_dimension_numbers<[1], [0], [0], [1], [0, 0, 1, 1], [], []>} : vector<16x8xf32>, vector<8x12xf32>, vector<16x12xf32> -> vector<16x12xf32>
    %10 = arith.addf %4, %9 : vector<16x12xf32>
    %c2_12 = arith.constant 2 : index
    %c0_13 = arith.constant 0 : index
    %c0_14 = arith.constant 0 : index
    %11 = vector.load %arg4[%c2_12, %c0_13, %c0_14] : memref<3x16x8xf32, #tpu.memory_space<vmem>>, vector<1x16x8xf32>
    %12 = vector.shape_cast %11 : vector<1x16x8xf32> to vector<16x8xf32>
    %c0_15 = arith.constant 0 : index
    %c0_16 = arith.constant 0 : index
    %c0_17 = arith.constant 0 : index
    %c4 = arith.constant 4 : index
    %13 = vector.load %arg2[%c0_15, %c0_16, %c0_17, %c4] : memref<1x1x8x16xf32, #tpu.memory_space<vmem>>, vector<1x1x8x12xf32>
    %14 = vector.shape_cast %13 : vector<1x1x8x12xf32> to vector<8x12xf32>
    %cst_18 = arith.constant dense<0.000000e+00> : vector<16x12xf32>
    %15 = tpu.matmul %12, %14, %cst_18 {dimension_numbers = #tpu.dot_dimension_numbers<[1], [0], [0], [1], [0, 0, 1, 1], [], []>} : vector<16x8xf32>, vector<8x12xf32>, vector<16x12xf32> -> vector<16x12xf32>
    %16 = arith.addf %10, %15 : vector<16x12xf32>
    %c0_19 = arith.constant 0 : index
    %c0_20 = arith.constant 0 : index
    %17 = vector.load %arg5[%c0_19, %c0_20] : memref<16x8xf32, #tpu.memory_space<vmem>>, vector<16x8xf32>
    %c0_21 = arith.constant 0 : index
    %c0_22 = arith.constant 0 : index
    %c0_23 = arith.constant 0 : index
    %18 = vector.load %arg3[%c0_21, %c0_22, %c0_23] : memref<1x8x12xf32, #tpu.memory_space<vmem>>, vector<1x8x12xf32>
    %19 = vector.shape_cast %18 : vector<1x8x12xf32> to vector<8x12xf32>
    %cst_24 = arith.constant dense<0.000000e+00> : vector<16x12xf32>
    %20 = tpu.matmul %17, %19, %cst_24 {dimension_numbers = #tpu.dot_dimension_numbers<[1], [0], [0], [1], [0, 0, 1, 1], [], []>} : vector<16x8xf32>, vector<8x12xf32>, vector<16x12xf32> -> vector<16x12xf32>
    %21 = arith.addf %16, %20 : vector<16x12xf32>
    %c0_25 = arith.constant 0 : index
    %c0_26 = arith.constant 0 : index
    %22 = vector.load %arg6[%c0_25, %c0_26] : memref<16x1xf32, #tpu.memory_space<vmem>>, vector<16x1xf32>
    %23 = vector.broadcast %22 : vector<16x1xf32> to vector<16x12xf32>
    %24 = arith.addf %21, %23 : vector<16x12xf32>
    %25 = vector.extract_strided_slice %24 {offsets = [0, 0], sizes = [8, 12], strides = [1, 1]} : vector<16x12xf32> to vector<8x12xf32>
    %26 = vector.extract_strided_slice %24 {offsets = [8, 0], sizes = [8, 12], strides = [1, 1]} : vector<16x12xf32> to vector<8x12xf32>
    %27 = math.tanh %25 : vector<8x12xf32>
    %28 = arith.negf %26 : vector<8x12xf32>
    %29 = math.exp %28 : vector<8x12xf32>
    %cst_27 = arith.constant 1.000000e+00 : f32
    %30 = vector.broadcast %cst_27 : f32 to vector<8x12xf32>
    %31 = arith.addf %30, %29 : vector<8x12xf32>
    %32 = arith.divf %30, %31 : vector<8x12xf32>
    %33 = arith.mulf %27, %32 : vector<8x12xf32>
    %c0_28 = arith.constant 0 : index
    %c0_29 = arith.constant 0 : index
    %c0_30 = arith.constant 0 : index
    %34 = vector.load %arg7[%c0_28, %c0_29, %c0_30] : memref<1x8x12xf32, #tpu.memory_space<vmem>>, vector<1x8x12xf32>
    %35 = vector.shape_cast %34 : vector<1x8x12xf32> to vector<8x12xf32>
    %36 = vector.shape_cast %33 : vector<8x12xf32> to vector<1x8x12xf32>
    tpu.vector_store %arg7[%c0_28, %c0_29, %c0_30], %36 {strides = array<i32>} : memref<1x8x12xf32, #tpu.memory_space<vmem>>, vector<1x8x12xf32>,
    return
  }
  func.func @transform_0(%arg0: i32, %arg1: i32) -> (i32, i32, i32, i32) {
    %c0_i32 = arith.constant 0 : i32
    %c0_i32_0 = arith.constant 0 : i32
    %c0_i32_1 = arith.constant 0 : i32
    return %arg0, %arg1, %c0_i32, %c0_i32_0 : i32, i32, i32, i32
  }
  func.func @transform_1(%arg0: i32, %arg1: i32) -> (i32, i32, i32) {
    %c0_i32 = arith.constant 0 : i32
    %c0_i32_0 = arith.constant 0 : i32
    return %arg0, %c0_i32, %arg1 : i32, i32, i32
  }
  func.func @transform_2(%arg0: i32, %arg1: i32) -> (i32, i32, i32) {
    %c0_i32 = arith.constant 0 : i32
    %c0_i32_0 = arith.constant 0 : i32
    %c0_i32_1 = arith.constant 0 : i32
    %c0_i32_2 = arith.constant 0 : i32
    return %c0_i32, %c0_i32_0, %c0_i32_1 : i32, i32, i32
  }
  func.func @transform_3(%arg0: i32, %arg1: i32) -> (i32, i32) {
    %c0_i32 = arith.constant 0 : i32
    %c0_i32_0 = arith.constant 0 : i32
    %c0_i32_1 = arith.constant 0 : i32
    return %c0_i32, %c0_i32_0 : i32, i32
  }
  func.func @transform_4(%arg0: i32, %arg1: i32) -> (i32, i32) {
    %c0_i32 = arith.constant 0 : i32
    %c0_i32_0 = arith.constant 0 : i32
    %c0_i32_1 = arith.constant 0 : i32
    return %c0_i32, %c0_i32_0 : i32, i32
  }
  func.func @transform_5(%arg0: i32, %arg1: i32) -> (i32, i32, i32) {
    %c0_i32 = arith.constant 0 : i32
    %c0_i32_0 = arith.constant 0 : i32
    return %arg0, %c0_i32, %arg1 : i32, i32, i32
  }
}

module attributes {stable_mosaic.version = 11 : i64} {
  func.func @kernel(%arg0: i32, %arg1: i32, %arg2: memref<1x1x8x16xf32, #tpu.memory_space<vmem>>, %arg3: memref<1x8x12xf32, #tpu.memory_space<vmem>>, %arg4: memref<3x16x8xf32, #tpu.memory_space<vmem>>, %arg5: memref<16x8xf32, #tpu.memory_space<vmem>>, %arg6: memref<16x1xf32, #tpu.memory_space<vmem>>, %arg7: memref<1x8x12xf32, #tpu.memory_space<vmem>>) attributes {dimension_semantics = [#tpu.dimension_semantics<parallel>, #tpu.dimension_semantics<parallel>], iteration_bounds = array<i64: 2, 1>, scalar_prefetch = 0 : i64, scratch_operands = 0 : i64, tpu.core_type = #tpu.core_type<tc>, window_params = [{transform_indices = @transform_0, window_bounds = array<i64: 1, 1, 8, 16>}, {transform_indices = @transform_1, window_bounds = array<i64: 1, 8, 12>}, {pipeline_mode = #tpu.pipeline_mode<synchronous>, transform_indices = @transform_2, window_bounds = array<i64: 3, 16, 8>}, {pipeline_mode = #tpu.pipeline_mode<synchronous>, transform_indices = @transform_3, window_bounds = array<i64: 16, 8>}, {pipeline_mode = #tpu.pipeline_mode<synchronous>, transform_indices = @transform_4, window_bounds = array<i64: 16, 1>}, {transform_indices = @transform_5, window_bounds = array<i64: 1, 8, 12>}]} {
    %c0 = arith.constant 0 : index
    %c0_0 = arith.constant 0 : index
    %c0_1 = arith.constant 0 : index
    %0 = vector.load %arg4[%c0, %c0_0, %c0_1] : memref<3x16x8xf32, #tpu.memory_space<vmem>>, vector<1x16x8xf32>
    %1 = vector.shape_cast %0 : vector<1x16x8xf32> to vector<16x8xf32>
    %c0_2 = arith.constant 0 : index
    %c0_3 = arith.constant 0 : index
    %c0_4 = arith.constant 0 : index
    %c0_5 = arith.constant 0 : index
    %2 = vector.load %arg2[%c0_2, %c0_3, %c0_4, %c0_5] : memref<1x1x8x16xf32, #tpu.memory_space<vmem>>, vector<1x1x8x12xf32>
    %3 = vector.shape_cast %2 : vector<1x1x8x12xf32> to vector<8x12xf32>
    %cst = arith.constant dense<0.000000e+00> : vector<16x12xf32>
    %4 = tpu.matmul %1, %3, %cst {dimension_numbers = #tpu.dot_dimension_numbers<[1], [0], [0], [1], [0, 0, 1, 1], [], []>} : vector<16x8xf32>, vector<8x12xf32>, vector<16x12xf32> -> vector<16x12xf32>
    %c1 = arith.constant 1 : index
    %c0_6 = arith.constant 0 : index
    %c0_7 = arith.constant 0 : index
    %5 = vector.load %arg4[%c1, %c0_6, %c0_7] : memref<3x16x8xf32, #tpu.memory_space<vmem>>, vector<1x16x8xf32>
    %6 = vector.shape_cast %5 : vector<1x16x8xf32> to vector<16x8xf32>
    %c0_8 = arith.constant 0 : index
    %c0_9 = arith.constant 0 : index
    %c0_10 = arith.constant 0 : index
    %c2 = arith.constant 2 : index
    %7 = vector.load %arg2[%c0_8, %c0_9, %c0_10, %c2] : memref<1x1x8x16xf32, #tpu.memory_space<vmem>>, vector<1x1x8x12xf32>
    %8 = vector.shape_cast %7 : vector<1x1x8x12xf32> to vector<8x12xf32>
    %cst_11 = arith.constant dense<0.000000e+00> : vector<16x12xf32>
    %9 = tpu.matmul %6, %8, %cst_11 {dimension_numbers = #tpu.dot_dimension_numbers<[1], [0], [0], [1], [0, 0, 1, 1], [], []>} : vector<16x8xf32>, vector<8x12xf32>, vector<16x12xf32> -> vector<16x12xf32>
    %10 = arith.addf %4, %9 : vector<16x12xf32>
    %c2_12 = arith.constant 2 : index
    %c0_13 = arith.constant 0 : index
    %c0_14 = arith.constant 0 : index
    %11 = vector.load %arg4[%c2_12, %c0_13, %c0_14] : memref<3x16x8xf32, #tpu.memory_space<vmem>>, vector<1x16x8xf32>
    %12 = vector.shape_cast %11 : vector<1x16x8xf32> to vector<16x8xf32>
    %c0_15 = arith.constant 0 : index
    %c0_16 = arith.constant 0 : index
    %c0_17 = arith.constant 0 : index
    %c4 = arith.constant 4 : index
    %13 = vector.load %arg2[%c0_15, %c0_16, %c0_17, %c4] : memref<1x1x8x16xf32, #tpu.memory_space<vmem>>, vector<1x1x8x12xf32>
    %14 = vector.shape_cast %13 : vector<1x1x8x12xf32> to vector<8x12xf32>
    %cst_18 = arith.constant dense<0.000000e+00> : vector<16x12xf32>
    %15 = tpu.matmul %12, %14, %cst_18 {dimension_numbers = #tpu.dot_dimension_numbers<[1], [0], [0], [1], [0, 0, 1, 1], [], []>} : vector<16x8xf32>, vector<8x12xf32>, vector<16x12xf32> -> vector<16x12xf32>
    %16 = arith.addf %10, %15 : vector<16x12xf32>
    %c0_19 = arith.constant 0 : index
    %c0_20 = arith.constant 0 : index
    %17 = vector.load %arg5[%c0_19, %c0_20] : memref<16x8xf32, #tpu.memory_space<vmem>>, vector<16x8xf32>
    %c0_21 = arith.constant 0 : index
    %c0_22 = arith.constant 0 : index
    %c0_23 = arith.constant 0 : index
    %18 = vector.load %arg3[%c0_21, %c0_22, %c0_23] : memref<1x8x12xf32, #tpu.memory_space<vmem>>, vector<1x8x12xf32>
    %19 = vector.shape_cast %18 : vector<1x8x12xf32> to vector<8x12xf32>
    %cst_24 = arith.constant dense<0.000000e+00> : vector<16x12xf32>
    %20 = tpu.matmul %17, %19, %cst_24 {dimension_numbers = #tpu.dot_dimension_numbers<[1], [0], [0], [1], [0, 0, 1, 1], [], []>} : vector<16x8xf32>, vector<8x12xf32>, vector<16x12xf32> -> vector<16x12xf32>
    %21 = arith.addf %16, %20 : vector<16x12xf32>
    %c0_25 = arith.constant 0 : index
    %c0_26 = arith.constant 0 : index
    %22 = vector.load %arg6[%c0_25, %c0_26] : memref<16x1xf32, #tpu.memory_space<vmem>>, vector<16x1xf32>
    %23 = vector.broadcast %22 : vector<16x1xf32> to vector<16x12xf32>
    %24 = arith.addf %21, %23 : vector<16x12xf32>
    %25 = vector.extract_strided_slice %24 {offsets = [0, 0], sizes = [8, 12], strides = [1, 1]} : vector<16x12xf32> to vector<8x12xf32>
    %26 = vector.extract_strided_slice %24 {offsets = [8, 0], sizes = [8, 12], strides = [1, 1]} : vector<16x12xf32> to vector<8x12xf32>
    %27 = math.tanh %25 : vector<8x12xf32>
    %28 = arith.negf %26 : vector<8x12xf32>
    %29 = math.exp %28 : vector<8x12xf32>
    %cst_27 = arith.constant 1.000000e+00 : f32
    %30 = vector.broadcast %cst_27 : f32 to vector<8x12xf32>
    %31 = arith.addf %30, %29 : vector<8x12xf32>
    %32 = arith.divf %30, %31 : vector<8x12xf32>
    %33 = arith.mulf %27, %32 : vector<8x12xf32>
    %c0_28 = arith.constant 0 : index
    %c0_29 = arith.constant 0 : index
    %c0_30 = arith.constant 0 : index
    %34 = vector.load %arg7[%c0_28, %c0_29, %c0_30] : memref<1x8x12xf32, #tpu.memory_space<vmem>>, vector<1x8x12xf32>
    %35 = vector.shape_cast %34 : vector<1x8x12xf32> to vector<8x12xf32>
    %36 = vector.shape_cast %33 : vector<8x12xf32> to vector<1x8x12xf32>
    tpu.vector_store %arg7[%c0_28, %c0_29, %c0_30], %36 {strides = array<i32>} : memref<1x8x12xf32, #tpu.memory_space<vmem>>, vector<1x8x12xf32>,
    return
  }
  func.func @transform_0(%arg0: i32, %arg1: i32) -> (i32, i32, i32, i32) {
    %c0_i32 = arith.constant 0 : i32
    %c0_i32_0 = arith.constant 0 : i32
    %c0_i32_1 = arith.constant 0 : i32
    return %arg0, %arg1, %c0_i32, %c0_i32_0 : i32, i32, i32, i32
  }
  func.func @transform_1(%arg0: i32, %arg1: i32) -> (i32, i32, i32) {
    %c0_i32 = arith.constant 0 : i32
    %c0_i32_0 = arith.constant 0 : i32
    return %arg0, %c0_i32, %arg1 : i32, i32, i32
  }
  func.func @transform_2(%arg0: i32, %arg1: i32) -> (i32, i32, i32) {
    %c0_i32 = arith.constant 0 : i32
    %c0_i32_0 = arith.constant 0 : i32
    %c0_i32_1 = arith.constant 0 : i32
    %c0_i32_2 = arith.constant 0 : i32
    return %c0_i32, %c0_i32_0, %c0_i32_1 : i32, i32, i32
  }
  func.func @transform_3(%arg0: i32, %arg1: i32) -> (i32, i32) {
    %c0_i32 = arith.constant 0 : i32
    %c0_i32_0 = arith.constant 0 : i32
    %c0_i32_1 = arith.constant 0 : i32
    return %c0_i32, %c0_i32_0 : i32, i32
  }
  func.func @transform_4(%arg0: i32, %arg1: i32) -> (i32, i32) {
    %c0_i32 = arith.constant 0 : i32
    %c0_i32_0 = arith.constant 0 : i32
    %c0_i32_1 = arith.constant 0 : i32
    return %c0_i32, %c0_i32_0 : i32, i32
  }
  func.func @transform_5(%arg0: i32, %arg1: i32) -> (i32, i32, i32) {
    %c0_i32 = arith.constant 0 : i32
    %c0_i32_0 = arith.constant 0 : i32
    return %arg0, %c0_i32, %arg1 : i32, i32, i32
  }
}

</mosaic_0001>

<llo_original>
// kernel: tpu_custom_call.1
$region0: #{tpu_custom_call.1}
  #allocation0 [shape = 'u32[]', space=smem, size = 0x4, offset = 0x4, fixed_abs, tag = 'smem constant byte address 0x4 - core index']
  #allocation1 [shape = 'u32[144,128]{1,0:T(1,128)}', space=vmem, size = 0x12000, scoped, tag = 'internal scratch']
  %s0 = inlined_call_operand.vmem [shape: f32[2,1,8,16], index: 0, kind: input, shape index: {}]
  %s1 = inlined_call_operand.vmem [shape: f32[2,8,12], index: 1, kind: input, shape index: {}]
  %s2 = inlined_call_operand.vmem [shape: f32[3,16,8], index: 2, kind: input, shape index: {}]
  %s3 = inlined_call_operand.vmem [shape: f32[16,8], index: 3, kind: input, shape index: {}]
  %s4 = inlined_call_operand.vmem [shape: f32[16,1], index: 4, kind: input, shape index: {}]
  %s5 = inlined_call_operand.hbm [shape: f32[2,8,12], index: 5, kind: output, shape index: {}]
  %s6 = sld [smem:[#allocation0]]
  $region53: #{tpu_custom_call.1} parent=0
    _
  %s8 = ssub.s32 1, %s6
  %s9 = scalar_select 0, %s8, %s6
  $region1: #{tpu_custom_call.1} parent=0
    #allocation2 [shape = 'u8[8192]{0}', space=vmem, size = 0x2000, scoped, tag = 'output window, operand 0']
    #allocation3 [shape = 's32[2]{0}', space=sflag, size = 0x8, scoped, tag = 'scoped memory for tpu_custom_call.1']
    %10 = vsyncpa [#allocation3], 0
    %s11 = scalar_lea.sflag [#allocation3], 1
    %12 = vsyncpa %s11, 0
    loop: start=0, step=1, limit=4
    $region2: #{tpu_custom_call.1} parent=1 // loop_pre_header
      _
    $region3: #{tpu_custom_call.1} parent=1 // loop_header
      %s14 = sphi 0, %s18
      %p15 = scmp.ge.s32.totalorder %s14, 4
      %s21 = sphi 0, %s33
      %s22 = sphi 0, %s29
      %s23 = sphi 0, %s21
      %s24 = sphi 0, %s22
      %s25 = sphi 0, %s23
      %s26 = sphi 0, %s24
      %s38 = sphi 0, %s40
      %s41 = sphi 0, %s38
      %s42 = sphi 0, %s41
      %s58 = sphi 0, %s42
      %s66 = sphi 0, %s68
      %s69 = sphi 0, %s66
      %s70 = sphi 0, %s69
      %s86 = sphi 0, %s70
      %s90 = sphi 0, %s90
      %s92 = sphi 0, %s90
      %s93 = sphi 0, %s92
      %s107 = sphi 0, %s93
      %s111 = sphi 0, %s111
      %s113 = sphi 0, %s111
      %s114 = sphi 0, %s113
      %s128 = sphi 0, %s114
      %s132 = sphi 0, %s132
      %s134 = sphi 0, %s132
      %s135 = sphi 0, %s134
      %s149 = sphi 0, %s135
      %s157 = sphi 0, %s159
      %s160 = sphi 0, %s157
      %s161 = sphi 0, %s160
      %s177 = sphi 0, %s161
    $region4: #{tpu_custom_call.1} parent=1 // loop_header_branch
      %17 = sbr.rel (%p15) target = $region8
    $region5: #{tpu_custom_call.1} parent=1 // loop_body
      %s19 = ssub.s32 %s14, 1
      %s20 = ssub.s32 %s14, 2
      %s27 = sadd.s32 1, %s22
      %p28 = scmp.ge.s32.totalorder %s27, 1
      %s29 = scalar_select %p28, 0, %s27
      %s30 = sadd.s32 1, %s21
      %s31 = scalar_select %p28, %s30, %s21
      %p32 = scmp.ge.s32.totalorder %s31, 2
      %s33 = scalar_select %p32, 0, %s31
      %s34 = ssub.s32 %s21, %s33
      %s35 = ssub.s32 %s22, %s29
      %s36 = sor.u32 %s34, %s35
      %p37 = scmp.eq.s32.totalorder %s36, 0
      %s39 = sadd.s32 %s38, 1
      %s40 = scalar_select %p37, %s38, %s39
      %p43 = pneg %p37
      %p44 = scmp.eq.s32.totalorder %s14, 1
      %p45 = por %p43, %p44
      %p46 = scmp.ne.s32.totalorder %s38, %s41
      %p47 = scmp.eq.s32.totalorder %s14, 0
      %p48 = por %p46, %p47
      %p49 = scmp.ne.s32.totalorder %s38, %s41
      %p50 = scmp.eq.s32.totalorder %s19, 1
      %p51 = por %p49, %p50
      %p52 = scmp.ne.s32.totalorder %s41, %s42
      %p53 = scmp.eq.s32.totalorder %s19, 0
      %p54 = por %p52, %p53
      %p55 = scmp.ne.s32.totalorder %s41, %s42
      %p56 = scmp.eq.s32.totalorder %s20, 1
      %p57 = por %p55, %p56
      %p59 = scmp.ne.s32.totalorder %s42, %s58
      %p60 = scmp.eq.s32.totalorder %s20, 0
      %p61 = por %p59, %p60
      %s62 = ssub.s32 %s21, %s33
      %s63 = ssub.s32 %s22, %s29
      %s64 = sor.u32 %s62, %s63
      %p65 = scmp.eq.s32.totalorder %s64, 0
      %s67 = sadd.s32 %s66, 1
      %s68 = scalar_select %p65, %s66, %s67
      %p71 = pneg %p65
      %p72 = scmp.eq.s32.totalorder %s14, 1
      %p73 = por %p71, %p72
      %p74 = scmp.ne.s32.totalorder %s66, %s69
      %p75 = scmp.eq.s32.totalorder %s14, 0
      %p76 = por %p74, %p75
      %p77 = scmp.ne.s32.totalorder %s66, %s69
      %p78 = scmp.eq.s32.totalorder %s19, 1
      %p79 = por %p77, %p78
      %p80 = scmp.ne.s32.totalorder %s69, %s70
      %p81 = scmp.eq.s32.totalorder %s19, 0
      %p82 = por %p80, %p81
      %p83 = scmp.ne.s32.totalorder %s69, %s70
      %p84 = scmp.eq.s32.totalorder %s20, 1
      %p85 = por %p83, %p84
      %p87 = scmp.ne.s32.totalorder %s70, %s86
      %p88 = scmp.eq.s32.totalorder %s20, 0
      %p89 = por %p87, %p88
      %s91 = sadd.s32 %s90, 1
      %p94 = scmp.eq.s32.totalorder %s14, 1
      %p95 = scmp.ne.s32.totalorder %s90, %s92
      %p96 = scmp.eq.s32.totalorder %s14, 0
      %p97 = por %p95, %p96
      %p98 = scmp.ne.s32.totalorder %s90, %s92
      %p99 = scmp.eq.s32.totalorder %s19, 1
      %p100 = por %p98, %p99
      %p101 = scmp.ne.s32.totalorder %s92, %s93
      %p102 = scmp.eq.s32.totalorder %s19, 0
      %p103 = por %p101, %p102
      %p104 = scmp.ne.s32.totalorder %s92, %s93
      %p105 = scmp.eq.s32.totalorder %s20, 1
      %p106 = por %p104, %p105
      %p108 = scmp.ne.s32.totalorder %s93, %s107
      %p109 = scmp.eq.s32.totalorder %s20, 0
      %p110 = por %p108, %p109
      %s112 = sadd.s32 %s111, 1
      %p115 = scmp.eq.s32.totalorder %s14, 1
      %p116 = scmp.ne.s32.totalorder %s111, %s113
      %p117 = scmp.eq.s32.totalorder %s14, 0
      %p118 = por %p116, %p117
      %p119 = scmp.ne.s32.totalorder %s111, %s113
      %p120 = scmp.eq.s32.totalorder %s19, 1
      %p121 = por %p119, %p120
      %p122 = scmp.ne.s32.totalorder %s113, %s114
      %p123 = scmp.eq.s32.totalorder %s19, 0
      %p124 = por %p122, %p123
      %p125 = scmp.ne.s32.totalorder %s113, %s114
      %p126 = scmp.eq.s32.totalorder %s20, 1
      %p127 = por %p125, %p126
      %p129 = scmp.ne.s32.totalorder %s114, %s128
      %p130 = scmp.eq.s32.totalorder %s20, 0
      %p131 = por %p129, %p130
      %s133 = sadd.s32 %s132, 1
      %p136 = scmp.eq.s32.totalorder %s14, 1
      %p137 = scmp.ne.s32.totalorder %s132, %s134
      %p138 = scmp.eq.s32.totalorder %s14, 0
      %p139 = por %p137, %p138
      %p140 = scmp.ne.s32.totalorder %s132, %s134
      %p141 = scmp.eq.s32.totalorder %s19, 1
      %p142 = por %p140, %p141
      %p143 = scmp.ne.s32.totalorder %s134, %s135
      %p144 = scmp.eq.s32.totalorder %s19, 0
      %p145 = por %p143, %p144
      %p146 = scmp.ne.s32.totalorder %s134, %s135
      %p147 = scmp.eq.s32.totalorder %s20, 1
      %p148 = por %p146, %p147
      %p150 = scmp.ne.s32.totalorder %s135, %s149
      %p151 = scmp.eq.s32.totalorder %s20, 0
      %p152 = por %p150, %p151
      %s153 = ssub.s32 %s21, %s33
      %s154 = ssub.s32 %s22, %s29
      %s155 = sor.u32 %s153, %s154
      %p156 = scmp.eq.s32.totalorder %s155, 0
      %s158 = sadd.s32 %s157, 1
      %s159 = scalar_select %p156, %s157, %s158
      %p162 = pneg %p156
      %p163 = scmp.eq.s32.totalorder %s14, 1
      %p164 = por %p162, %p163
      %p165 = scmp.ne.s32.totalorder %s157, %s160
      %p166 = scmp.eq.s32.totalorder %s14, 0
      %p167 = por %p165, %p166
      %p168 = scmp.ne.s32.totalorder %s157, %s160
      %p169 = scmp.eq.s32.totalorder %s19, 1
      %p170 = por %p168, %p169
      %p171 = scmp.ne.s32.totalorder %s160, %s161
      %p172 = scmp.eq.s32.totalorder %s19, 0
      %p173 = por %p171, %p172
      %p174 = scmp.ne.s32.totalorder %s160, %s161
      %p175 = scmp.eq.s32.totalorder %s20, 1
      %p176 = por %p174, %p175
      %p178 = scmp.ne.s32.totalorder %s161, %s177
      %p179 = scmp.eq.s32.totalorder %s20, 0
      %p180 = por %p178, %p179
      %p181 = scmp.le.s32.totalorder 1, %s14
      %p182 = scmp.lt.s32.totalorder %s14, 3
      %p183 = pnand %p181, %p182
      %p184 = pneg %p183
      // Predicated region
      $region9: #{tpu_custom_call.1} parent=5 // pred_check
        _
      $region10: #{tpu_custom_call.1} parent=5 // pred_check_branch
        %186 = sbr.rel (%p183) target = $region12
      $region11: #{tpu_custom_call.1} parent=5 // pred_region
        %s187 = ssub.s32 %s14, 1
        // Predicated region
        $region13: #{tpu_custom_call.1} parent=11 // pred_check
          %p188 = pneg %p103
        $region14: #{tpu_custom_call.1} parent=11 // pred_check_branch
          %190 = sbr.rel (%p188) target = $region16
        $region15: #{tpu_custom_call.1} parent=11 // pred_region
          _
        $region16: #{tpu_custom_call.1} parent=11 // pred_fallthru
          _
        // Predicated region
        $region17: #{tpu_custom_call.1} parent=11 // pred_check
          %p191 = pneg %p124
        $region18: #{tpu_custom_call.1} parent=11 // pred_check_branch
          %193 = sbr.rel (%p191) target = $region20
        $region19: #{tpu_custom_call.1} parent=11 // pred_region
          _
        $region20: #{tpu_custom_call.1} parent=11 // pred_fallthru
          _
        // Predicated region
        $region21: #{tpu_custom_call.1} parent=11 // pred_check
          %p194 = pneg %p145
        $region22: #{tpu_custom_call.1} parent=11 // pred_check_branch
          %196 = sbr.rel (%p194) target = $region24
        $region23: #{tpu_custom_call.1} parent=11 // pred_region
          _
        $region24: #{tpu_custom_call.1} parent=11 // pred_fallthru
          _
      $region12: #{tpu_custom_call.1} parent=5 // pred_fallthru
        _
      %p197 = scmp.lt.s32.totalorder %s14, 2
      // Predicated region
      $region25: #{tpu_custom_call.1} parent=5 // pred_check
        %p198 = pneg %p197
      $region26: #{tpu_custom_call.1} parent=5 // pred_check_branch
        %200 = sbr.rel (%p198) target = $region28
      $region27: #{tpu_custom_call.1} parent=5 // pred_region
        // Predicated region
        $region29: #{tpu_custom_call.1} parent=27 // pred_check
          %p201 = pneg %p48
        $region30: #{tpu_custom_call.1} parent=27 // pred_check_branch
          %203 = sbr.rel (%p201) target = $region32
        $region31: #{tpu_custom_call.1} parent=27 // pred_region
          %p204 = scmp.lt.s32.totalorder %s21, 1
          %s205 = scalar_select %p204, %s21, 1
          %p206 = scmp.lt.s32.totalorder %s22, 0
          %s207 = scalar_select %p206, %s22, 0
          %s208 = sadd.s32 %s207, %s205
          %s209 = smul.addr %s208, 8
          %s210 = scalar_lea.vmem %s0, %s209
        $region32: #{tpu_custom_call.1} parent=27 // pred_fallthru
          _
        // Predicated region
        $region33: #{tpu_custom_call.1} parent=27 // pred_check
          %p211 = pneg %p76
        $region34: #{tpu_custom_call.1} parent=27 // pred_check_branch
          %213 = sbr.rel (%p211) target = $region36
        $region35: #{tpu_custom_call.1} parent=27 // pred_region
          %p214 = scmp.lt.s32.totalorder %s21, 1
          %s215 = scalar_select %p214, %s21, 1
          %p216 = scmp.lt.s32.totalorder %s22, 0
          %s217 = scalar_select %p216, %s22, 0
          %s218 = sadd.s32 %s217, %s215
          %s219 = smul.addr %s218, 8
          %s220 = scalar_lea.vmem %s1, %s219
        $region36: #{tpu_custom_call.1} parent=27 // pred_fallthru
          _
      $region28: #{tpu_custom_call.1} parent=5 // pred_fallthru
        _
      %p221 = scmp.le.s32.totalorder 1, %s14
      %p222 = scmp.lt.s32.totalorder %s14, 3
      %p223 = pnand %p221, %p222
      %p224 = pneg %p223
      // Predicated region
      $region37: #{tpu_custom_call.1} parent=5 // pred_check
        _
      $region38: #{tpu_custom_call.1} parent=5 // pred_check_branch
        %226 = sbr.rel (%p223) target = $region40
      $region39: #{tpu_custom_call.1} parent=5 // pred_region
        %s227 = ssub.s32 %s14, 1
        %p228 = scmp.lt.s32.totalorder %s23, 1
        %s229 = scalar_select %p228, %s23, 1
        %p230 = scmp.lt.s32.totalorder %s24, 0
        %s231 = scalar_select %p230, %s24, 0
        %s232 = sadd.s32 %s231, %s229
        %s233 = smul.addr %s232, 8
        %s234 = scalar_lea.vmem %s0, %s233
        %p235 = pneg %p54
        %p236 = pneg %p51
        %p237 = scmp.lt.s32.totalorder %s23, 1
        %s238 = scalar_select %p237, %s23, 1
        %p239 = scmp.lt.s32.totalorder %s24, 0
        %s240 = scalar_select %p239, %s24, 0
        %s241 = sadd.s32 %s240, %s238
        %s242 = smul.addr %s241, 8
        %s243 = scalar_lea.vmem %s1, %s242
        %p244 = pneg %p82
        %p245 = pneg %p79
        %p246 = pneg %p103
        %p247 = pneg %p100
        %p248 = pneg %p124
        %p249 = pneg %p121
        %p250 = pneg %p145
        %p251 = pneg %p142
        %p252 = pneg %p173
        %p253 = pneg %p170
        %s254 = sand.u32 %s160, 1
        %s255 = scalar_lea.sflag [#allocation3], %s254
        %s256 = sand.u32 %s160, 1
        %s257 = smul.addr %s256, 8
        %s258 = scalar_lea.vmem [#allocation2], %s257
        %p259 = scmp.lt.s32.totalorder %s23, 1
        %s260 = scalar_select %p259, %s23, 1
        %p261 = scmp.lt.s32.totalorder %s24, 0
        %s262 = scalar_select %p261, %s24, 0
        %s263 = sadd.s32 %s262, %s260
        %s264 = smul.addr %s263, 8
        %s265 = scalar_lea.vmem %s0, %s264
        %p266 = scmp.lt.s32.totalorder %s23, 1
        %s267 = scalar_select %p266, %s23, 1
        %p268 = scmp.lt.s32.totalorder %s24, 0
        %s269 = scalar_select %p268, %s24, 0
        %s270 = sadd.s32 %s269, %s267
        %s271 = smul.addr %s270, 8
        %s272 = scalar_lea.vmem %s1, %s271
        %v273 = vld [vmem:[%s2] sm:$0xff]
        %v274 = vld [vmem:[%s2 + $0x8] sm:$0xff]
        %v275 = vld [vmem:[%s265] sm:$0xff]
        %s276 = scalar_lea.vmem %s2, 16
        %v277 = vld [vmem:[%s276] sm:$0xff]
        %v278 = vld [vmem:[%s276 + $0x8] sm:$0xff]
        %280 = vrot.lane.b32.xlu0 %v275, 126
        %v281 = vpop.permute.xlu0 %280
        %vm283 = vcmask 64512
        %v285 = vsel %vm283, %v277, 0
        %v288 = vsel %vm283, %v278, 0
        %290 = vmatprep.subr.mxu0 0.0
        %291 = vmatpush1.msra.mxu0 0.0
        %292 = vmatprep.subr.mxu0 0.0
        %293 = vmatpush1.msra.mxu0 0.0
        %294 = vmatprep.subr.mxu0 0.0
        %295 = vmatpush1.msra.mxu0 0.0
        %296 = vmatprep.subr.mxu0 0.0
        %297 = vmatpush1.msra.mxu0 0.0
        %298 = vmatprep.subr.mxu0 0.0
        %299 = vmatpush1.msra.mxu0 0.0
        %300 = vmatprep.subr.mxu0 0.0
        %301 = vmatpush1.msra.mxu0 0.0
        %302 = vmatprep.subr.mxu0 0.0
        %303 = vmatpush1.msra.mxu0 0.0
        %304 = vmatprep.subr.mxu0 0.0
        %305 = vmatpush1.msra.mxu0 0.0
        %306 = vmatprep.subr.mxu0 0.0
        %307 = vmatpush1.msra.mxu0 0.0
        %308 = vmatprep.subr.mxu0 0.0
        %309 = vmatpush1.msra.mxu0 0.0
        %310 = vmatprep.subr.mxu0 0.0
        %311 = vmatpush1.msra.mxu0 0.0
        %312 = vmatprep.subr.mxu0 0.0
        %313 = vmatpush1.msra.mxu0 0.0
        %314 = vmatprep.subr.mxu0 0.0
        %315 = vmatpush1.msra.mxu0 0.0
        %316 = vmatprep.subr.mxu0 0.0
        %317 = vmatpush1.msra.mxu0 0.0
        %318 = vmatprep.subr.mxu0 0.0
        %319 = vmatpush1.msra.mxu0 0.0
        %320 = vmatprep.subr.mxu0 0.0
        %321 = vmatpush1.msra.mxu0 %v281
        %322 = vmatprep.subr.mxu0 0.0
        %323 = vmatpush2.msra.mxu0 0.0
        %324 = vmatprep.subr.mxu0 0.0
        %325 = vmatpush2.msra.mxu0 0.0
        %326 = vmatprep.subr.mxu0 0.0
        %327 = vmatpush2.msra.mxu0 0.0
        %328 = vmatprep.subr.mxu0 0.0
        %329 = vmatpush2.msra.mxu0 0.0
        %330 = vmatprep.subr.mxu0 0.0
        %331 = vmatpush2.msra.mxu0 0.0
        %332 = vmatprep.subr.mxu0 0.0
        %333 = vmatpush2.msra.mxu0 0.0
        %334 = vmatprep.subr.mxu0 0.0
        %335 = vmatpush2.msra.mxu0 0.0
        %336 = vmatprep.subr.mxu0 0.0
        %337 = vmatpush2.msra.mxu0 0.0
        %338 = vmatprep.subr.mxu0 0.0
        %339 = vmatpush2.msra.mxu0 0.0
        %340 = vmatprep.subr.mxu0 0.0
        %341 = vmatpush2.msra.mxu0 0.0
        %342 = vmatprep.subr.mxu0 0.0
        %343 = vmatpush2.msra.mxu0 0.0
        %344 = vmatprep.subr.mxu0 0.0
        %345 = vmatpush2.msra.mxu0 0.0
        %346 = vmatprep.subr.mxu0 0.0
        %347 = vmatpush2.msra.mxu0 0.0
        %348 = vmatprep.subr.mxu0 0.0
        %349 = vmatpush2.msra.mxu0 0.0
        %350 = vmatprep.subr.mxu0 0.0
        %351 = vmatpush2.msra.mxu0 0.0
        %352 = vmatprep.subr.mxu0 0.0
        %353 = vmatpush2.msra.mxu0 0.0
        %354 = vmatprep.mubr.f32.mxu0 0.0
        %355 = vmatmul.mubr.f32.gmra.mxu0 %v285
        %v356 = vpop.f32.mrf.mxu0
        %v357 = vadd.f32 0.0, %v356
        %v358 = vpop.f32.mrf.mxu0
        %359 = vmatprep.mubr.f32.mxu0 0.0
        %360 = vmatmul.mubr.f32.gmra.mxu0 %v288
        %v361 = vpop.f32.mrf.mxu0
        %v362 = vadd.f32 0.0, %v361
        %v363 = vpop.f32.mrf.mxu0
        %364 = vdwg.mxu0
        %v366 = vsel %vm283, %v273, 0
        %v369 = vsel %vm283, %v274, 0
        %371 = vmatprep.subr.mxu0 0.0
        %372 = vmatpush1.msra.mxu0 0.0
        %373 = vmatprep.subr.mxu0 0.0
        %374 = vmatpush1.msra.mxu0 0.0
        %375 = vmatprep.subr.mxu0 0.0
        %376 = vmatpush1.msra.mxu0 0.0
        %377 = vmatprep.subr.mxu0 0.0
        %378 = vmatpush1.msra.mxu0 0.0
        %379 = vmatprep.subr.mxu0 0.0
        %380 = vmatpush1.msra.mxu0 0.0
        %381 = vmatprep.subr.mxu0 0.0
        %382 = vmatpush1.msra.mxu0 0.0
        %383 = vmatprep.subr.mxu0 0.0
        %384 = vmatpush1.msra.mxu0 0.0
        %385 = vmatprep.subr.mxu0 0.0
        %386 = vmatpush1.msra.mxu0 0.0
        %387 = vmatprep.subr.mxu0 0.0
        %388 = vmatpush1.msra.mxu0 0.0
        %389 = vmatprep.subr.mxu0 0.0
        %390 = vmatpush1.msra.mxu0 0.0
        %391 = vmatprep.subr.mxu0 0.0
        %392 = vmatpush1.msra.mxu0 0.0
        %393 = vmatprep.subr.mxu0 0.0
        %394 = vmatpush1.msra.mxu0 0.0
        %395 = vmatprep.subr.mxu0 0.0
        %396 = vmatpush1.msra.mxu0 0.0
        %397 = vmatprep.subr.mxu0 0.0
        %398 = vmatpush1.msra.mxu0 0.0
        %399 = vmatprep.subr.mxu0 0.0
        %400 = vmatpush1.msra.mxu0 0.0
        %401 = vmatprep.subr.mxu0 0.0
        %402 = vmatpush1.msra.mxu0 %v275
        %403 = vmatprep.subr.mxu0 0.0
        %404 = vmatpush2.msra.mxu0 0.0
        %405 = vmatprep.subr.mxu0 0.0
        %406 = vmatpush2.msra.mxu0 0.0
        %407 = vmatprep.subr.mxu0 0.0
        %408 = vmatpush2.msra.mxu0 0.0
        %409 = vmatprep.subr.mxu0 0.0
        %410 = vmatpush2.msra.mxu0 0.0
        %411 = vmatprep.subr.mxu0 0.0
        %412 = vmatpush2.msra.mxu0 0.0
        %413 = vmatprep.subr.mxu0 0.0
        %414 = vmatpush2.msra.mxu0 0.0
        %415 = vmatprep.subr.mxu0 0.0
        %416 = vmatpush2.msra.mxu0 0.0
        %417 = vmatprep.subr.mxu0 0.0
        %418 = vmatpush2.msra.mxu0 0.0
        %419 = vmatprep.subr.mxu0 0.0
        %420 = vmatpush2.msra.mxu0 0.0
        %421 = vmatprep.subr.mxu0 0.0
        %422 = vmatpush2.msra.mxu0 0.0
        %423 = vmatprep.subr.mxu0 0.0
        %424 = vmatpush2.msra.mxu0 0.0
        %425 = vmatprep.subr.mxu0 0.0
        %426 = vmatpush2.msra.mxu0 0.0
        %427 = vmatprep.subr.mxu0 0.0
        %428 = vmatpush2.msra.mxu0 0.0
        %429 = vmatprep.subr.mxu0 0.0
        %430 = vmatpush2.msra.mxu0 0.0
        %431 = vmatprep.subr.mxu0 0.0
        %432 = vmatpush2.msra.mxu0 0.0
        %433 = vmatprep.subr.mxu0 0.0
        %434 = vmatpush2.msra.mxu0 0.0
        %435 = vmatprep.mubr.f32.mxu0 0.0
        %436 = vmatmul.mubr.f32.gmra.mxu0 %v366
        %v437 = vpop.f32.mrf.mxu0
        %v438 = vadd.f32 %v357, %v437
        %v439 = vpop.f32.mrf.mxu0
        %440 = vmatprep.mubr.f32.mxu0 0.0
        %441 = vmatmul.mubr.f32.gmra.mxu0 %v369
        %v442 = vpop.f32.mrf.mxu0
        %v443 = vadd.f32 %v362, %v442
        %v444 = vpop.f32.mrf.mxu0
        %445 = vdwg.mxu0
        %s446 = scalar_lea.vmem %s2, 32
        %v447 = vld [vmem:[%s446] sm:$0xff]
        %v448 = vld [vmem:[%s446 + $0x8] sm:$0xff]
        %449 = vrot.lane.b32.xlu0 %v275, 124
        %v450 = vpop.permute.xlu0 %449
        %v453 = vsel %vm283, %v447, 0
        %v456 = vsel %vm283, %v448, 0
        %458 = vmatprep.subr.mxu0 0.0
        %459 = vmatpush1.msra.mxu0 0.0
        %460 = vmatprep.subr.mxu0 0.0
        %461 = vmatpush1.msra.mxu0 0.0
        %462 = vmatprep.subr.mxu0 0.0
        %463 = vmatpush1.msra.mxu0 0.0
        %464 = vmatprep.subr.mxu0 0.0
        %465 = vmatpush1.msra.mxu0 0.0
        %466 = vmatprep.subr.mxu0 0.0
        %467 = vmatpush1.msra.mxu0 0.0
        %468 = vmatprep.subr.mxu0 0.0
        %469 = vmatpush1.msra.mxu0 0.0
        %470 = vmatprep.subr.mxu0 0.0
        %471 = vmatpush1.msra.mxu0 0.0
        %472 = vmatprep.subr.mxu0 0.0
        %473 = vmatpush1.msra.mxu0 0.0
        %474 = vmatprep.subr.mxu0 0.0
        %475 = vmatpush1.msra.mxu0 0.0
        %476 = vmatprep.subr.mxu0 0.0
        %477 = vmatpush1.msra.mxu0 0.0
        %478 = vmatprep.subr.mxu0 0.0
        %479 = vmatpush1.msra.mxu0 0.0
        %480 = vmatprep.subr.mxu0 0.0
        %481 = vmatpush1.msra.mxu0 0.0
        %482 = vmatprep.subr.mxu0 0.0
        %483 = vmatpush1.msra.mxu0 0.0
        %484 = vmatprep.subr.mxu0 0.0
        %485 = vmatpush1.msra.mxu0 0.0
        %486 = vmatprep.subr.mxu0 0.0
        %487 = vmatpush1.msra.mxu0 0.0
        %488 = vmatprep.subr.mxu0 0.0
        %489 = vmatpush1.msra.mxu0 %v450
        %490 = vmatprep.subr.mxu0 0.0
        %491 = vmatpush2.msra.mxu0 0.0
        %492 = vmatprep.subr.mxu0 0.0
        %493 = vmatpush2.msra.mxu0 0.0
        %494 = vmatprep.subr.mxu0 0.0
        %495 = vmatpush2.msra.mxu0 0.0
        %496 = vmatprep.subr.mxu0 0.0
        %497 = vmatpush2.msra.mxu0 0.0
        %498 = vmatprep.subr.mxu0 0.0
        %499 = vmatpush2.msra.mxu0 0.0
        %500 = vmatprep.subr.mxu0 0.0
        %501 = vmatpush2.msra.mxu0 0.0
        %502 = vmatprep.subr.mxu0 0.0
        %503 = vmatpush2.msra.mxu0 0.0
        %504 = vmatprep.subr.mxu0 0.0
        %505 = vmatpush2.msra.mxu0 0.0
        %506 = vmatprep.subr.mxu0 0.0
        %507 = vmatpush2.msra.mxu0 0.0
        %508 = vmatprep.subr.mxu0 0.0
        %509 = vmatpush2.msra.mxu0 0.0
        %510 = vmatprep.subr.mxu0 0.0
        %511 = vmatpush2.msra.mxu0 0.0
        %512 = vmatprep.subr.mxu0 0.0
        %513 = vmatpush2.msra.mxu0 0.0
        %514 = vmatprep.subr.mxu0 0.0
        %515 = vmatpush2.msra.mxu0 0.0
        %516 = vmatprep.subr.mxu0 0.0
        %517 = vmatpush2.msra.mxu0 0.0
        %518 = vmatprep.subr.mxu0 0.0
        %519 = vmatpush2.msra.mxu0 0.0
        %520 = vmatprep.subr.mxu0 0.0
        %521 = vmatpush2.msra.mxu0 0.0
        %522 = vmatprep.mubr.f32.mxu0 0.0
        %523 = vmatmul.mubr.f32.gmra.mxu0 %v453
        %v524 = vpop.f32.mrf.mxu0
        %v525 = vadd.f32 0.0, %v524
        %v526 = vpop.f32.mrf.mxu0
        %527 = vmatprep.mubr.f32.mxu0 0.0
        %528 = vmatmul.mubr.f32.gmra.mxu0 %v456
        %v529 = vpop.f32.mrf.mxu0
        %v530 = vadd.f32 0.0, %v529
        %v531 = vpop.f32.mrf.mxu0
        %532 = vdwg.mxu0
        %v533 = vadd.f32 %v438, %v525
        %v534 = vadd.f32 %v443, %v530
        %v535 = vld [vmem:[%s3] sm:$0xff]
        %v536 = vld [vmem:[%s3 + $0x8] sm:$0xff]
        %v537 = vld [vmem:[%s272] sm:$0xff]
        %v539 = vsel %vm283, %v535, 0
        %v542 = vsel %vm283, %v536, 0
        %544 = vmatprep.subr.mxu0 0.0
        %545 = vmatpush1.msra.mxu0 0.0
        %546 = vmatprep.subr.mxu0 0.0
        %547 = vmatpush1.msra.mxu0 0.0
        %548 = vmatprep.subr.mxu0 0.0
        %549 = vmatpush1.msra.mxu0 0.0
        %550 = vmatprep.subr.mxu0 0.0
        %551 = vmatpush1.msra.mxu0 0.0
        %552 = vmatprep.subr.mxu0 0.0
        %553 = vmatpush1.msra.mxu0 0.0
        %554 = vmatprep.subr.mxu0 0.0
        %555 = vmatpush1.msra.mxu0 0.0
        %556 = vmatprep.subr.mxu0 0.0
        %557 = vmatpush1.msra.mxu0 0.0
        %558 = vmatprep.subr.mxu0 0.0
        %559 = vmatpush1.msra.mxu0 0.0
        %560 = vmatprep.subr.mxu0 0.0
        %561 = vmatpush1.msra.mxu0 0.0
        %562 = vmatprep.subr.mxu0 0.0
        %563 = vmatpush1.msra.mxu0 0.0
        %564 = vmatprep.subr.mxu0 0.0
        %565 = vmatpush1.msra.mxu0 0.0
        %566 = vmatprep.subr.mxu0 0.0
        %567 = vmatpush1.msra.mxu0 0.0
        %568 = vmatprep.subr.mxu0 0.0
        %569 = vmatpush1.msra.mxu0 0.0
        %570 = vmatprep.subr.mxu0 0.0
        %571 = vmatpush1.msra.mxu0 0.0
        %572 = vmatprep.subr.mxu0 0.0
        %573 = vmatpush1.msra.mxu0 0.0
        %574 = vmatprep.subr.mxu0 0.0
        %575 = vmatpush1.msra.mxu0 %v537
        %576 = vmatprep.subr.mxu0 0.0
        %577 = vmatpush2.msra.mxu0 0.0
        %578 = vmatprep.subr.mxu0 0.0
        %579 = vmatpush2.msra.mxu0 0.0
        %580 = vmatprep.subr.mxu0 0.0
        %581 = vmatpush2.msra.mxu0 0.0
        %582 = vmatprep.subr.mxu0 0.0
        %583 = vmatpush2.msra.mxu0 0.0
        %584 = vmatprep.subr.mxu0 0.0
        %585 = vmatpush2.msra.mxu0 0.0
        %586 = vmatprep.subr.mxu0 0.0
        %587 = vmatpush2.msra.mxu0 0.0
        %588 = vmatprep.subr.mxu0 0.0
        %589 = vmatpush2.msra.mxu0 0.0
        %590 = vmatprep.subr.mxu0 0.0
        %591 = vmatpush2.msra.mxu0 0.0
        %592 = vmatprep.subr.mxu0 0.0
        %593 = vmatpush2.msra.mxu0 0.0
        %594 = vmatprep.subr.mxu0 0.0
        %595 = vmatpush2.msra.mxu0 0.0
        %596 = vmatprep.subr.mxu0 0.0
        %597 = vmatpush2.msra.mxu0 0.0
        %598 = vmatprep.subr.mxu0 0.0
        %599 = vmatpush2.msra.mxu0 0.0
        %600 = vmatprep.subr.mxu0 0.0
        %601 = vmatpush2.msra.mxu0 0.0
        %602 = vmatprep.subr.mxu0 0.0
        %603 = vmatpush2.msra.mxu0 0.0
        %604 = vmatprep.subr.mxu0 0.0
        %605 = vmatpush2.msra.mxu0 0.0
        %606 = vmatprep.subr.mxu0 0.0
        %607 = vmatpush2.msra.mxu0 0.0
        %608 = vmatprep.mubr.f32.mxu0 0.0
        %609 = vmatmul.mubr.f32.gmra.mxu0 %v539
        %v610 = vpop.f32.mrf.mxu0
        %v611 = vadd.f32 0.0, %v610
        %v612 = vpop.f32.mrf.mxu0
        %613 = vmatprep.mubr.f32.mxu0 0.0
        %614 = vmatmul.mubr.f32.gmra.mxu0 %v542
        %v615 = vpop.f32.mrf.mxu0
        %v616 = vadd.f32 0.0, %v615
        %v617 = vpop.f32.mrf.mxu0
        %618 = vdwg.mxu0
        %v619 = vadd.f32 %v533, %v611
        %v620 = vadd.f32 %v534, %v616
        %v621 = vld [vmem:[%s4] sm:$0xff]
        %v622 = vld [vmem:[%s4 + $0x8] sm:$0xff]
        %624 = vset.pattern.permute.xlu0 0
        %625 = vperm.xlu0 %624, %v621
        %v626 = vpop.permute.xlu0 %625
        %629 = vset.pattern.permute.xlu0 0
        %630 = vperm.xlu0 %629, %v622
        %v631 = vpop.permute.xlu0 %630
        %v633 = vadd.f32 %v619, %v626
        %v634 = vadd.f32 %v620, %v631
        %v635 = vtanh.pop %v633
        %v636 = vxor.u32 %v634, 2147483648
        %v637 = vmul.f32 %v636, 1.442695
        %v638 = vpow.pop %v637
        %v639 = vadd.f32 %v638, 1.0
        %v640 = vrcp.pop %v639
        %v641 = vmul.f32 1.0, %v640
        %v642 = vmul.f32 %v635, %v641
        %vm643 = vcmask 97280
        %644 = vst.msk [vmem:[%s258] sm:$0xff] %vm643, %v642
        %s645 = sand.u32 %s160, 1
        %s646 = scalar_lea.sflag [#allocation3], %s645
        %s647 = sand.u32 %s160, 1
        %s648 = smul.addr %s647, 8
        %s649 = scalar_lea.vmem [#allocation2], %s648
        // Predicated region
        $region41: #{tpu_custom_call.1} parent=39 // pred_check
          %p650 = pneg %p170
        $region42: #{tpu_custom_call.1} parent=39 // pred_check_branch
          %652 = sbr.rel (%p650) target = $region44
        $region43: #{tpu_custom_call.1} parent=39 // pred_region
          %s654 = ssub.s32 128, 128
          %655 = vsyncadd %s646, %s654
          %s656 = sadd.s32 %s24, %s23
          %s657 = smul.addr %s656, 128
          %s658 = scalar_lea.hbm %s5, %s657
          %s660 = sshll.u32 %s649, 4
          %s661 = int_to_ptr.vmem [resolvable:$true] %s660
          %663 = dma.vmem_to_hbm [thread:$0]  %s661, 128, %s658, %s646
        $region44: #{tpu_custom_call.1} parent=39 // pred_fallthru
          _
      $region40: #{tpu_custom_call.1} parent=5 // pred_fallthru
        _
      %p664 = scmp.le.s32.totalorder 2, %s14
      // Predicated region
      $region45: #{tpu_custom_call.1} parent=5 // pred_check
        %p665 = pneg %p664
      $region46: #{tpu_custom_call.1} parent=5 // pred_check_branch
        %667 = sbr.rel (%p665) target = $region48
      $region47: #{tpu_custom_call.1} parent=5 // pred_region
        %s668 = ssub.s32 %s14, 2
        // Predicated region
        $region49: #{tpu_custom_call.1} parent=47 // pred_check
          %p669 = pneg %p176
        $region50: #{tpu_custom_call.1} parent=47 // pred_check_branch
          %671 = sbr.rel (%p669) target = $region52
        $region51: #{tpu_custom_call.1} parent=47 // pred_region
          %s672 = sand.u32 %s161, 1
          %s673 = scalar_lea.sflag [#allocation3], %s672
          %s674 = sand.u32 %s161, 1
          %s675 = smul.addr %s674, 8
          %s676 = scalar_lea.vmem [#allocation2], %s675
          %677 = dma.done %s673, 128
        $region52: #{tpu_custom_call.1} parent=47 // pred_fallthru
          _
      $region48: #{tpu_custom_call.1} parent=5 // pred_fallthru
        _
    $region6: #{tpu_custom_call.1} parent=1 // loop_footer
      %s18 = sadd.s32 1, %s14
    $region7: #{tpu_custom_call.1} parent=1 // loop_footer_branch
      %13 = sbr.rel target = $region3
    $region8: #{tpu_custom_call.1} parent=1 // loop_exit
      _
    %678 = vsyncpa [#allocation3], 1
    %s679 = scalar_lea.sflag [#allocation3], 1
    %680 = vsyncpa %s679, 1

// kernel: tpu_custom_call.1
$region0: #{tpu_custom_call.1}
  #allocation0 [shape = 'u32[]', space=smem, size = 0x4, offset = 0x4, fixed_abs, tag = 'smem constant byte address 0x4 - core index']
  #allocation1 [shape = 'u32[144,128]{1,0:T(1,128)}', space=vmem, size = 0x12000, scoped, tag = 'internal scratch']
  %s0 = inlined_call_operand.vmem [shape: f32[2,1,8,16], index: 0, kind: input, shape index: {}]
  %s1 = inlined_call_operand.vmem [shape: f32[2,8,12], index: 1, kind: input, shape index: {}]
  %s2 = inlined_call_operand.vmem [shape: f32[3,16,8], index: 2, kind: input, shape index: {}]
  %s3 = inlined_call_operand.vmem [shape: f32[16,8], index: 3, kind: input, shape index: {}]
  %s4 = inlined_call_operand.vmem [shape: f32[16,1], index: 4, kind: input, shape index: {}]
  %s5 = inlined_call_operand.hbm [shape: f32[2,8,12], index: 5, kind: output, shape index: {}]
  %s6 = sld [smem:[#allocation0]]
  $region53: #{tpu_custom_call.1} parent=0
    _
  %s8 = ssub.s32 1, %s6
  %s9 = scalar_select 0, %s8, %s6
  $region1: #{tpu_custom_call.1} parent=0
    #allocation2 [shape = 'u8[8192]{0}', space=vmem, size = 0x2000, scoped, tag = 'output window, operand 0']
    #allocation3 [shape = 's32[2]{0}', space=sflag, size = 0x8, scoped, tag = 'scoped memory for tpu_custom_call.1']
    %10 = vsyncpa [#allocation3], 0
    %s11 = scalar_lea.sflag [#allocation3], 1
    %12 = vsyncpa %s11, 0
    loop: start=0, step=1, limit=4
    $region2: #{tpu_custom_call.1} parent=1 // loop_pre_header
      _
    $region3: #{tpu_custom_call.1} parent=1 // loop_header
      %s14 = sphi 0, %s18
      %p15 = scmp.ge.s32.totalorder %s14, 4
      %s21 = sphi 0, %s33
      %s22 = sphi 0, %s29
      %s23 = sphi 0, %s21
      %s24 = sphi 0, %s22
      %s25 = sphi 0, %s23
      %s26 = sphi 0, %s24
      %s38 = sphi 0, %s40
      %s41 = sphi 0, %s38
      %s42 = sphi 0, %s41
      %s58 = sphi 0, %s42
      %s66 = sphi 0, %s68
      %s69 = sphi 0, %s66
      %s70 = sphi 0, %s69
      %s86 = sphi 0, %s70
      %s90 = sphi 0, %s90
      %s92 = sphi 0, %s90
      %s93 = sphi 0, %s92
      %s107 = sphi 0, %s93
      %s111 = sphi 0, %s111
      %s113 = sphi 0, %s111
      %s114 = sphi 0, %s113
      %s128 = sphi 0, %s114
      %s132 = sphi 0, %s132
      %s134 = sphi 0, %s132
      %s135 = sphi 0, %s134
      %s149 = sphi 0, %s135
      %s157 = sphi 0, %s159
      %s160 = sphi 0, %s157
      %s161 = sphi 0, %s160
      %s177 = sphi 0, %s161
    $region4: #{tpu_custom_call.1} parent=1 // loop_header_branch
      %17 = sbr.rel (%p15) target = $region8
    $region5: #{tpu_custom_call.1} parent=1 // loop_body
      %s19 = ssub.s32 %s14, 1
      %s20 = ssub.s32 %s14, 2
      %s27 = sadd.s32 1, %s22
      %p28 = scmp.ge.s32.totalorder %s27, 1
      %s29 = scalar_select %p28, 0, %s27
      %s30 = sadd.s32 1, %s21
      %s31 = scalar_select %p28, %s30, %s21
      %p32 = scmp.ge.s32.totalorder %s31, 2
      %s33 = scalar_select %p32, 0, %s31
      %s34 = ssub.s32 %s21, %s33
      %s35 = ssub.s32 %s22, %s29
      %s36 = sor.u32 %s34, %s35
      %p37 = scmp.eq.s32.totalorder %s36, 0
      %s39 = sadd.s32 %s38, 1
      %s40 = scalar_select %p37, %s38, %s39
      %p43 = pneg %p37
      %p44 = scmp.eq.s32.totalorder %s14, 1
      %p45 = por %p43, %p44
      %p46 = scmp.ne.s32.totalorder %s38, %s41
      %p47 = scmp.eq.s32.totalorder %s14, 0
      %p48 = por %p46, %p47
      %p49 = scmp.ne.s32.totalorder %s38, %s41
      %p50 = scmp.eq.s32.totalorder %s19, 1
      %p51 = por %p49, %p50
      %p52 = scmp.ne.s32.totalorder %s41, %s42
      %p53 = scmp.eq.s32.totalorder %s19, 0
      %p54 = por %p52, %p53
      %p55 = scmp.ne.s32.totalorder %s41, %s42
      %p56 = scmp.eq.s32.totalorder %s20, 1
      %p57 = por %p55, %p56
      %p59 = scmp.ne.s32.totalorder %s42, %s58
      %p60 = scmp.eq.s32.totalorder %s20, 0
      %p61 = por %p59, %p60
      %s62 = ssub.s32 %s21, %s33
      %s63 = ssub.s32 %s22, %s29
      %s64 = sor.u32 %s62, %s63
      %p65 = scmp.eq.s32.totalorder %s64, 0
      %s67 = sadd.s32 %s66, 1
      %s68 = scalar_select %p65, %s66, %s67
      %p71 = pneg %p65
      %p72 = scmp.eq.s32.totalorder %s14, 1
      %p73 = por %p71, %p72
      %p74 = scmp.ne.s32.totalorder %s66, %s69
      %p75 = scmp.eq.s32.totalorder %s14, 0
      %p76 = por %p74, %p75
      %p77 = scmp.ne.s32.totalorder %s66, %s69
      %p78 = scmp.eq.s32.totalorder %s19, 1
      %p79 = por %p77, %p78
      %p80 = scmp.ne.s32.totalorder %s69, %s70
      %p81 = scmp.eq.s32.totalorder %s19, 0
      %p82 = por %p80, %p81
      %p83 = scmp.ne.s32.totalorder %s69, %s70
      %p84 = scmp.eq.s32.totalorder %s20, 1
      %p85 = por %p83, %p84
      %p87 = scmp.ne.s32.totalorder %s70, %s86
      %p88 = scmp.eq.s32.totalorder %s20, 0
      %p89 = por %p87, %p88
      %s91 = sadd.s32 %s90, 1
      %p94 = scmp.eq.s32.totalorder %s14, 1
      %p95 = scmp.ne.s32.totalorder %s90, %s92
      %p96 = scmp.eq.s32.totalorder %s14, 0
      %p97 = por %p95, %p96
      %p98 = scmp.ne.s32.totalorder %s90, %s92
      %p99 = scmp.eq.s32.totalorder %s19, 1
      %p100 = por %p98, %p99
      %p101 = scmp.ne.s32.totalorder %s92, %s93
      %p102 = scmp.eq.s32.totalorder %s19, 0
      %p103 = por %p101, %p102
      %p104 = scmp.ne.s32.totalorder %s92, %s93
      %p105 = scmp.eq.s32.totalorder %s20, 1
      %p106 = por %p104, %p105
      %p108 = scmp.ne.s32.totalorder %s93, %s107
      %p109 = scmp.eq.s32.totalorder %s20, 0
      %p110 = por %p108, %p109
      %s112 = sadd.s32 %s111, 1
      %p115 = scmp.eq.s32.totalorder %s14, 1
      %p116 = scmp.ne.s32.totalorder %s111, %s113
      %p117 = scmp.eq.s32.totalorder %s14, 0
      %p118 = por %p116, %p117
      %p119 = scmp.ne.s32.totalorder %s111, %s113
      %p120 = scmp.eq.s32.totalorder %s19, 1
      %p121 = por %p119, %p120
      %p122 = scmp.ne.s32.totalorder %s113, %s114
      %p123 = scmp.eq.s32.totalorder %s19, 0
      %p124 = por %p122, %p123
      %p125 = scmp.ne.s32.totalorder %s113, %s114
      %p126 = scmp.eq.s32.totalorder %s20, 1
      %p127 = por %p125, %p126
      %p129 = scmp.ne.s32.totalorder %s114, %s128
      %p130 = scmp.eq.s32.totalorder %s20, 0
      %p131 = por %p129, %p130
      %s133 = sadd.s32 %s132, 1
      %p136 = scmp.eq.s32.totalorder %s14, 1
      %p137 = scmp.ne.s32.totalorder %s132, %s134
      %p138 = scmp.eq.s32.totalorder %s14, 0
      %p139 = por %p137, %p138
      %p140 = scmp.ne.s32.totalorder %s132, %s134
      %p141 = scmp.eq.s32.totalorder %s19, 1
      %p142 = por %p140, %p141
      %p143 = scmp.ne.s32.totalorder %s134, %s135
      %p144 = scmp.eq.s32.totalorder %s19, 0
      %p145 = por %p143, %p144
      %p146 = scmp.ne.s32.totalorder %s134, %s135
      %p147 = scmp.eq.s32.totalorder %s20, 1
      %p148 = por %p146, %p147
      %p150 = scmp.ne.s32.totalorder %s135, %s149
      %p151 = scmp.eq.s32.totalorder %s20, 0
      %p152 = por %p150, %p151
      %s153 = ssub.s32 %s21, %s33
      %s154 = ssub.s32 %s22, %s29
      %s155 = sor.u32 %s153, %s154
      %p156 = scmp.eq.s32.totalorder %s155, 0
      %s158 = sadd.s32 %s157, 1
      %s159 = scalar_select %p156, %s157, %s158
      %p162 = pneg %p156
      %p163 = scmp.eq.s32.totalorder %s14, 1
      %p164 = por %p162, %p163
      %p165 = scmp.ne.s32.totalorder %s157, %s160
      %p166 = scmp.eq.s32.totalorder %s14, 0
      %p167 = por %p165, %p166
      %p168 = scmp.ne.s32.totalorder %s157, %s160
      %p169 = scmp.eq.s32.totalorder %s19, 1
      %p170 = por %p168, %p169
      %p171 = scmp.ne.s32.totalorder %s160, %s161
      %p172 = scmp.eq.s32.totalorder %s19, 0
      %p173 = por %p171, %p172
      %p174 = scmp.ne.s32.totalorder %s160, %s161
      %p175 = scmp.eq.s32.totalorder %s20, 1
      %p176 = por %p174, %p175
      %p178 = scmp.ne.s32.totalorder %s161, %s177
      %p179 = scmp.eq.s32.totalorder %s20, 0
      %p180 = por %p178, %p179
      %p181 = scmp.le.s32.totalorder 1, %s14
      %p182 = scmp.lt.s32.totalorder %s14, 3
      %p183 = pnand %p181, %p182
      %p184 = pneg %p183
      // Predicated region
      $region9: #{tpu_custom_call.1} parent=5 // pred_check
        _
      $region10: #{tpu_custom_call.1} parent=5 // pred_check_branch
        %186 = sbr.rel (%p183) target = $region12
      $region11: #{tpu_custom_call.1} parent=5 // pred_region
        %s187 = ssub.s32 %s14, 1
        // Predicated region
        $region13: #{tpu_custom_call.1} parent=11 // pred_check
          %p188 = pneg %p103
        $region14: #{tpu_custom_call.1} parent=11 // pred_check_branch
          %190 = sbr.rel (%p188) target = $region16
        $region15: #{tpu_custom_call.1} parent=11 // pred_region
          _
        $region16: #{tpu_custom_call.1} parent=11 // pred_fallthru
          _
        // Predicated region
        $region17: #{tpu_custom_call.1} parent=11 // pred_check
          %p191 = pneg %p124
        $region18: #{tpu_custom_call.1} parent=11 // pred_check_branch
          %193 = sbr.rel (%p191) target = $region20
        $region19: #{tpu_custom_call.1} parent=11 // pred_region
          _
        $region20: #{tpu_custom_call.1} parent=11 // pred_fallthru
          _
        // Predicated region
        $region21: #{tpu_custom_call.1} parent=11 // pred_check
          %p194 = pneg %p145
        $region22: #{tpu_custom_call.1} parent=11 // pred_check_branch
          %196 = sbr.rel (%p194) target = $region24
        $region23: #{tpu_custom_call.1} parent=11 // pred_region
          _
        $region24: #{tpu_custom_call.1} parent=11 // pred_fallthru
          _
      $region12: #{tpu_custom_call.1} parent=5 // pred_fallthru
        _
      %p197 = scmp.lt.s32.totalorder %s14, 2
      // Predicated region
      $region25: #{tpu_custom_call.1} parent=5 // pred_check
        %p198 = pneg %p197
      $region26: #{tpu_custom_call.1} parent=5 // pred_check_branch
        %200 = sbr.rel (%p198) target = $region28
      $region27: #{tpu_custom_call.1} parent=5 // pred_region
        // Predicated region
        $region29: #{tpu_custom_call.1} parent=27 // pred_check
          %p201 = pneg %p48
        $region30: #{tpu_custom_call.1} parent=27 // pred_check_branch
          %203 = sbr.rel (%p201) target = $region32
        $region31: #{tpu_custom_call.1} parent=27 // pred_region
          %p204 = scmp.lt.s32.totalorder %s21, 1
          %s205 = scalar_select %p204, %s21, 1
          %p206 = scmp.lt.s32.totalorder %s22, 0
          %s207 = scalar_select %p206, %s22, 0
          %s208 = sadd.s32 %s207, %s205
          %s209 = smul.addr %s208, 8
          %s210 = scalar_lea.vmem %s0, %s209
        $region32: #{tpu_custom_call.1} parent=27 // pred_fallthru
          _
        // Predicated region
        $region33: #{tpu_custom_call.1} parent=27 // pred_check
          %p211 = pneg %p76
        $region34: #{tpu_custom_call.1} parent=27 // pred_check_branch
          %213 = sbr.rel (%p211) target = $region36
        $region35: #{tpu_custom_call.1} parent=27 // pred_region
          %p214 = scmp.lt.s32.totalorder %s21, 1
          %s215 = scalar_select %p214, %s21, 1
          %p216 = scmp.lt.s32.totalorder %s22, 0
          %s217 = scalar_select %p216, %s22, 0
          %s218 = sadd.s32 %s217, %s215
          %s219 = smul.addr %s218, 8
          %s220 = scalar_lea.vmem %s1, %s219
        $region36: #{tpu_custom_call.1} parent=27 // pred_fallthru
          _
      $region28: #{tpu_custom_call.1} parent=5 // pred_fallthru
        _
      %p221 = scmp.le.s32.totalorder 1, %s14
      %p222 = scmp.lt.s32.totalorder %s14, 3
      %p223 = pnand %p221, %p222
      %p224 = pneg %p223
      // Predicated region
      $region37: #{tpu_custom_call.1} parent=5 // pred_check
        _
      $region38: #{tpu_custom_call.1} parent=5 // pred_check_branch
        %226 = sbr.rel (%p223) target = $region40
      $region39: #{tpu_custom_call.1} parent=5 // pred_region
        %s227 = ssub.s32 %s14, 1
        %p228 = scmp.lt.s32.totalorder %s23, 1
        %s229 = scalar_select %p228, %s23, 1
        %p230 = scmp.lt.s32.totalorder %s24, 0
        %s231 = scalar_select %p230, %s24, 0
        %s232 = sadd.s32 %s231, %s229
        %s233 = smul.addr %s232, 8
        %s234 = scalar_lea.vmem %s0, %s233
        %p235 = pneg %p54
        %p236 = pneg %p51
        %p237 = scmp.lt.s32.totalorder %s23, 1
        %s238 = scalar_select %p237, %s23, 1
        %p239 = scmp.lt.s32.totalorder %s24, 0
        %s240 = scalar_select %p239, %s24, 0
        %s241 = sadd.s32 %s240, %s238
        %s242 = smul.addr %s241, 8
        %s243 = scalar_lea.vmem %s1, %s242
        %p244 = pneg %p82
        %p245 = pneg %p79
        %p246 = pneg %p103
        %p247 = pneg %p100
        %p248 = pneg %p124
        %p249 = pneg %p121
        %p250 = pneg %p145
        %p251 = pneg %p142
        %p252 = pneg %p173
        %p253 = pneg %p170
        %s254 = sand.u32 %s160, 1
        %s255 = scalar_lea.sflag [#allocation3], %s254
        %s256 = sand.u32 %s160, 1
        %s257 = smul.addr %s256, 8
        %s258 = scalar_lea.vmem [#allocation2], %s257
        %p259 = scmp.lt.s32.totalorder %s23, 1
        %s260 = scalar_select %p259, %s23, 1
        %p261 = scmp.lt.s32.totalorder %s24, 0
        %s262 = scalar_select %p261, %s24, 0
        %s263 = sadd.s32 %s262, %s260
        %s264 = smul.addr %s263, 8
        %s265 = scalar_lea.vmem %s0, %s264
        %p266 = scmp.lt.s32.totalorder %s23, 1
        %s267 = scalar_select %p266, %s23, 1
        %p268 = scmp.lt.s32.totalorder %s24, 0
        %s269 = scalar_select %p268, %s24, 0
        %s270 = sadd.s32 %s269, %s267
        %s271 = smul.addr %s270, 8
        %s272 = scalar_lea.vmem %s1, %s271
        %v273 = vld [vmem:[%s2] sm:$0xff]
        %v274 = vld [vmem:[%s2 + $0x8] sm:$0xff]
        %v275 = vld [vmem:[%s265] sm:$0xff]
        %s276 = scalar_lea.vmem %s2, 16
        %v277 = vld [vmem:[%s276] sm:$0xff]
        %v278 = vld [vmem:[%s276 + $0x8] sm:$0xff]
        %280 = vrot.lane.b32.xlu0 %v275, 126
        %v281 = vpop.permute.xlu0 %280
        %vm283 = vcmask 64512
        %v285 = vsel %vm283, %v277, 0
        %v288 = vsel %vm283, %v278, 0
        %290 = vmatprep.subr.mxu0 0.0
        %291 = vmatpush1.msra.mxu0 0.0
        %292 = vmatprep.subr.mxu0 0.0
        %293 = vmatpush1.msra.mxu0 0.0
        %294 = vmatprep.subr.mxu0 0.0
        %295 = vmatpush1.msra.mxu0 0.0
        %296 = vmatprep.subr.mxu0 0.0
        %297 = vmatpush1.msra.mxu0 0.0
        %298 = vmatprep.subr.mxu0 0.0
        %299 = vmatpush1.msra.mxu0 0.0
        %300 = vmatprep.subr.mxu0 0.0
        %301 = vmatpush1.msra.mxu0 0.0
        %302 = vmatprep.subr.mxu0 0.0
        %303 = vmatpush1.msra.mxu0 0.0
        %304 = vmatprep.subr.mxu0 0.0
        %305 = vmatpush1.msra.mxu0 0.0
        %306 = vmatprep.subr.mxu0 0.0
        %307 = vmatpush1.msra.mxu0 0.0
        %308 = vmatprep.subr.mxu0 0.0
        %309 = vmatpush1.msra.mxu0 0.0
        %310 = vmatprep.subr.mxu0 0.0
        %311 = vmatpush1.msra.mxu0 0.0
        %312 = vmatprep.subr.mxu0 0.0
        %313 = vmatpush1.msra.mxu0 0.0
        %314 = vmatprep.subr.mxu0 0.0
        %315 = vmatpush1.msra.mxu0 0.0
        %316 = vmatprep.subr.mxu0 0.0
        %317 = vmatpush1.msra.mxu0 0.0
        %318 = vmatprep.subr.mxu0 0.0
        %319 = vmatpush1.msra.mxu0 0.0
        %320 = vmatprep.subr.mxu0 0.0
        %321 = vmatpush1.msra.mxu0 %v281
        %322 = vmatprep.subr.mxu0 0.0
        %323 = vmatpush2.msra.mxu0 0.0
        %324 = vmatprep.subr.mxu0 0.0
        %325 = vmatpush2.msra.mxu0 0.0
        %326 = vmatprep.subr.mxu0 0.0
        %327 = vmatpush2.msra.mxu0 0.0
        %328 = vmatprep.subr.mxu0 0.0
        %329 = vmatpush2.msra.mxu0 0.0
        %330 = vmatprep.subr.mxu0 0.0
        %331 = vmatpush2.msra.mxu0 0.0
        %332 = vmatprep.subr.mxu0 0.0
        %333 = vmatpush2.msra.mxu0 0.0
        %334 = vmatprep.subr.mxu0 0.0
        %335 = vmatpush2.msra.mxu0 0.0
        %336 = vmatprep.subr.mxu0 0.0
        %337 = vmatpush2.msra.mxu0 0.0
        %338 = vmatprep.subr.mxu0 0.0
        %339 = vmatpush2.msra.mxu0 0.0
        %340 = vmatprep.subr.mxu0 0.0
        %341 = vmatpush2.msra.mxu0 0.0
        %342 = vmatprep.subr.mxu0 0.0
        %343 = vmatpush2.msra.mxu0 0.0
        %344 = vmatprep.subr.mxu0 0.0
        %345 = vmatpush2.msra.mxu0 0.0
        %346 = vmatprep.subr.mxu0 0.0
        %347 = vmatpush2.msra.mxu0 0.0
        %348 = vmatprep.subr.mxu0 0.0
        %349 = vmatpush2.msra.mxu0 0.0
        %350 = vmatprep.subr.mxu0 0.0
        %351 = vmatpush2.msra.mxu0 0.0
        %352 = vmatprep.subr.mxu0 0.0
        %353 = vmatpush2.msra.mxu0 0.0
        %354 = vmatprep.mubr.f32.mxu0 0.0
        %355 = vmatmul.mubr.f32.gmra.mxu0 %v285
        %v356 = vpop.f32.mrf.mxu0
        %v357 = vadd.f32 0.0, %v356
        %v358 = vpop.f32.mrf.mxu0
        %359 = vmatprep.mubr.f32.mxu0 0.0
        %360 = vmatmul.mubr.f32.gmra.mxu0 %v288
        %v361 = vpop.f32.mrf.mxu0
        %v362 = vadd.f32 0.0, %v361
        %v363 = vpop.f32.mrf.mxu0
        %364 = vdwg.mxu0
        %v366 = vsel %vm283, %v273, 0
        %v369 = vsel %vm283, %v274, 0
        %371 = vmatprep.subr.mxu0 0.0
        %372 = vmatpush1.msra.mxu0 0.0
        %373 = vmatprep.subr.mxu0 0.0
        %374 = vmatpush1.msra.mxu0 0.0
        %375 = vmatprep.subr.mxu0 0.0
        %376 = vmatpush1.msra.mxu0 0.0
        %377 = vmatprep.subr.mxu0 0.0
        %378 = vmatpush1.msra.mxu0 0.0
        %379 = vmatprep.subr.mxu0 0.0
        %380 = vmatpush1.msra.mxu0 0.0
        %381 = vmatprep.subr.mxu0 0.0
        %382 = vmatpush1.msra.mxu0 0.0
        %383 = vmatprep.subr.mxu0 0.0
        %384 = vmatpush1.msra.mxu0 0.0
        %385 = vmatprep.subr.mxu0 0.0
        %386 = vmatpush1.msra.mxu0 0.0
        %387 = vmatprep.subr.mxu0 0.0
        %388 = vmatpush1.msra.mxu0 0.0
        %389 = vmatprep.subr.mxu0 0.0
        %390 = vmatpush1.msra.mxu0 0.0
        %391 = vmatprep.subr.mxu0 0.0
        %392 = vmatpush1.msra.mxu0 0.0
        %393 = vmatprep.subr.mxu0 0.0
        %394 = vmatpush1.msra.mxu0 0.0
        %395 = vmatprep.subr.mxu0 0.0
        %396 = vmatpush1.msra.mxu0 0.0
        %397 = vmatprep.subr.mxu0 0.0
        %398 = vmatpush1.msra.mxu0 0.0
        %399 = vmatprep.subr.mxu0 0.0
        %400 = vmatpush1.msra.mxu0 0.0
        %401 = vmatprep.subr.mxu0 0.0
        %402 = vmatpush1.msra.mxu0 %v275
        %403 = vmatprep.subr.mxu0 0.0
        %404 = vmatpush2.msra.mxu0 0.0
        %405 = vmatprep.subr.mxu0 0.0
        %406 = vmatpush2.msra.mxu0 0.0
        %407 = vmatprep.subr.mxu0 0.0
        %408 = vmatpush2.msra.mxu0 0.0
        %409 = vmatprep.subr.mxu0 0.0
        %410 = vmatpush2.msra.mxu0 0.0
        %411 = vmatprep.subr.mxu0 0.0
        %412 = vmatpush2.msra.mxu0 0.0
        %413 = vmatprep.subr.mxu0 0.0
        %414 = vmatpush2.msra.mxu0 0.0
        %415 = vmatprep.subr.mxu0 0.0
        %416 = vmatpush2.msra.mxu0 0.0
        %417 = vmatprep.subr.mxu0 0.0
        %418 = vmatpush2.msra.mxu0 0.0
        %419 = vmatprep.subr.mxu0 0.0
        %420 = vmatpush2.msra.mxu0 0.0
        %421 = vmatprep.subr.mxu0 0.0
        %422 = vmatpush2.msra.mxu0 0.0
        %423 = vmatprep.subr.mxu0 0.0
        %424 = vmatpush2.msra.mxu0 0.0
        %425 = vmatprep.subr.mxu0 0.0
        %426 = vmatpush2.msra.mxu0 0.0
        %427 = vmatprep.subr.mxu0 0.0
        %428 = vmatpush2.msra.mxu0 0.0
        %429 = vmatprep.subr.mxu0 0.0
        %430 = vmatpush2.msra.mxu0 0.0
        %431 = vmatprep.subr.mxu0 0.0
        %432 = vmatpush2.msra.mxu0 0.0
        %433 = vmatprep.subr.mxu0 0.0
        %434 = vmatpush2.msra.mxu0 0.0
        %435 = vmatprep.mubr.f32.mxu0 0.0
        %436 = vmatmul.mubr.f32.gmra.mxu0 %v366
        %v437 = vpop.f32.mrf.mxu0
        %v438 = vadd.f32 %v357, %v437
        %v439 = vpop.f32.mrf.mxu0
        %440 = vmatprep.mubr.f32.mxu0 0.0
        %441 = vmatmul.mubr.f32.gmra.mxu0 %v369
        %v442 = vpop.f32.mrf.mxu0
        %v443 = vadd.f32 %v362, %v442
        %v444 = vpop.f32.mrf.mxu0
        %445 = vdwg.mxu0
        %s446 = scalar_lea.vmem %s2, 32
        %v447 = vld [vmem:[%s446] sm:$0xff]
        %v448 = vld [vmem:[%s446 + $0x8] sm:$0xff]
        %449 = vrot.lane.b32.xlu0 %v275, 124
        %v450 = vpop.permute.xlu0 %449
        %v453 = vsel %vm283, %v447, 0
        %v456 = vsel %vm283, %v448, 0
        %458 = vmatprep.subr.mxu0 0.0
        %459 = vmatpush1.msra.mxu0 0.0
        %460 = vmatprep.subr.mxu0 0.0
        %461 = vmatpush1.msra.mxu0 0.0
        %462 = vmatprep.subr.mxu0 0.0
        %463 = vmatpush1.msra.mxu0 0.0
        %464 = vmatprep.subr.mxu0 0.0
        %465 = vmatpush1.msra.mxu0 0.0
        %466 = vmatprep.subr.mxu0 0.0
        %467 = vmatpush1.msra.mxu0 0.0
        %468 = vmatprep.subr.mxu0 0.0
        %469 = vmatpush1.msra.mxu0 0.0
        %470 = vmatprep.subr.mxu0 0.0
        %471 = vmatpush1.msra.mxu0 0.0
        %472 = vmatprep.subr.mxu0 0.0
        %473 = vmatpush1.msra.mxu0 0.0
        %474 = vmatprep.subr.mxu0 0.0
        %475 = vmatpush1.msra.mxu0 0.0
        %476 = vmatprep.subr.mxu0 0.0
        %477 = vmatpush1.msra.mxu0 0.0
        %478 = vmatprep.subr.mxu0 0.0
        %479 = vmatpush1.msra.mxu0 0.0
        %480 = vmatprep.subr.mxu0 0.0
        %481 = vmatpush1.msra.mxu0 0.0
        %482 = vmatprep.subr.mxu0 0.0
        %483 = vmatpush1.msra.mxu0 0.0
        %484 = vmatprep.subr.mxu0 0.0
        %485 = vmatpush1.msra.mxu0 0.0
        %486 = vmatprep.subr.mxu0 0.0
        %487 = vmatpush1.msra.mxu0 0.0
        %488 = vmatprep.subr.mxu0 0.0
        %489 = vmatpush1.msra.mxu0 %v450
        %490 = vmatprep.subr.mxu0 0.0
        %491 = vmatpush2.msra.mxu0 0.0
        %492 = vmatprep.subr.mxu0 0.0
        %493 = vmatpush2.msra.mxu0 0.0
        %494 = vmatprep.subr.mxu0 0.0
        %495 = vmatpush2.msra.mxu0 0.0
        %496 = vmatprep.subr.mxu0 0.0
        %497 = vmatpush2.msra.mxu0 0.0
        %498 = vmatprep.subr.mxu0 0.0
        %499 = vmatpush2.msra.mxu0 0.0
        %500 = vmatprep.subr.mxu0 0.0
        %501 = vmatpush2.msra.mxu0 0.0
        %502 = vmatprep.subr.mxu0 0.0
        %503 = vmatpush2.msra.mxu0 0.0
        %504 = vmatprep.subr.mxu0 0.0
        %505 = vmatpush2.msra.mxu0 0.0
        %506 = vmatprep.subr.mxu0 0.0
        %507 = vmatpush2.msra.mxu0 0.0
        %508 = vmatprep.subr.mxu0 0.0
        %509 = vmatpush2.msra.mxu0 0.0
        %510 = vmatprep.subr.mxu0 0.0
        %511 = vmatpush2.msra.mxu0 0.0
        %512 = vmatprep.subr.mxu0 0.0
        %513 = vmatpush2.msra.mxu0 0.0
        %514 = vmatprep.subr.mxu0 0.0
        %515 = vmatpush2.msra.mxu0 0.0
        %516 = vmatprep.subr.mxu0 0.0
        %517 = vmatpush2.msra.mxu0 0.0
        %518 = vmatprep.subr.mxu0 0.0
        %519 = vmatpush2.msra.mxu0 0.0
        %520 = vmatprep.subr.mxu0 0.0
        %521 = vmatpush2.msra.mxu0 0.0
        %522 = vmatprep.mubr.f32.mxu0 0.0
        %523 = vmatmul.mubr.f32.gmra.mxu0 %v453
        %v524 = vpop.f32.mrf.mxu0
        %v525 = vadd.f32 0.0, %v524
        %v526 = vpop.f32.mrf.mxu0
        %527 = vmatprep.mubr.f32.mxu0 0.0
        %528 = vmatmul.mubr.f32.gmra.mxu0 %v456
        %v529 = vpop.f32.mrf.mxu0
        %v530 = vadd.f32 0.0, %v529
        %v531 = vpop.f32.mrf.mxu0
        %532 = vdwg.mxu0
        %v533 = vadd.f32 %v438, %v525
        %v534 = vadd.f32 %v443, %v530
        %v535 = vld [vmem:[%s3] sm:$0xff]
        %v536 = vld [vmem:[%s3 + $0x8] sm:$0xff]
        %v537 = vld [vmem:[%s272] sm:$0xff]
        %v539 = vsel %vm283, %v535, 0
        %v542 = vsel %vm283, %v536, 0
        %544 = vmatprep.subr.mxu0 0.0
        %545 = vmatpush1.msra.mxu0 0.0
        %546 = vmatprep.subr.mxu0 0.0
        %547 = vmatpush1.msra.mxu0 0.0
        %548 = vmatprep.subr.mxu0 0.0
        %549 = vmatpush1.msra.mxu0 0.0
        %550 = vmatprep.subr.mxu0 0.0
        %551 = vmatpush1.msra.mxu0 0.0
        %552 = vmatprep.subr.mxu0 0.0
        %553 = vmatpush1.msra.mxu0 0.0
        %554 = vmatprep.subr.mxu0 0.0
        %555 = vmatpush1.msra.mxu0 0.0
        %556 = vmatprep.subr.mxu0 0.0
        %557 = vmatpush1.msra.mxu0 0.0
        %558 = vmatprep.subr.mxu0 0.0
        %559 = vmatpush1.msra.mxu0 0.0
        %560 = vmatprep.subr.mxu0 0.0
        %561 = vmatpush1.msra.mxu0 0.0
        %562 = vmatprep.subr.mxu0 0.0
        %563 = vmatpush1.msra.mxu0 0.0
        %564 = vmatprep.subr.mxu0 0.0
        %565 = vmatpush1.msra.mxu0 0.0
        %566 = vmatprep.subr.mxu0 0.0
        %567 = vmatpush1.msra.mxu0 0.0
        %568 = vmatprep.subr.mxu0 0.0
        %569 = vmatpush1.msra.mxu0 0.0
        %570 = vmatprep.subr.mxu0 0.0
        %571 = vmatpush1.msra.mxu0 0.0
        %572 = vmatprep.subr.mxu0 0.0
        %573 = vmatpush1.msra.mxu0 0.0
        %574 = vmatprep.subr.mxu0 0.0
        %575 = vmatpush1.msra.mxu0 %v537
        %576 = vmatprep.subr.mxu0 0.0
        %577 = vmatpush2.msra.mxu0 0.0
        %578 = vmatprep.subr.mxu0 0.0
        %579 = vmatpush2.msra.mxu0 0.0
        %580 = vmatprep.subr.mxu0 0.0
        %581 = vmatpush2.msra.mxu0 0.0
        %582 = vmatprep.subr.mxu0 0.0
        %583 = vmatpush2.msra.mxu0 0.0
        %584 = vmatprep.subr.mxu0 0.0
        %585 = vmatpush2.msra.mxu0 0.0
        %586 = vmatprep.subr.mxu0 0.0
        %587 = vmatpush2.msra.mxu0 0.0
        %588 = vmatprep.subr.mxu0 0.0
        %589 = vmatpush2.msra.mxu0 0.0
        %590 = vmatprep.subr.mxu0 0.0
        %591 = vmatpush2.msra.mxu0 0.0
        %592 = vmatprep.subr.mxu0 0.0
        %593 = vmatpush2.msra.mxu0 0.0
        %594 = vmatprep.subr.mxu0 0.0
        %595 = vmatpush2.msra.mxu0 0.0
        %596 = vmatprep.subr.mxu0 0.0
        %597 = vmatpush2.msra.mxu0 0.0
        %598 = vmatprep.subr.mxu0 0.0
        %599 = vmatpush2.msra.mxu0 0.0
        %600 = vmatprep.subr.mxu0 0.0
        %601 = vmatpush2.msra.mxu0 0.0
        %602 = vmatprep.subr.mxu0 0.0
        %603 = vmatpush2.msra.mxu0 0.0
        %604 = vmatprep.subr.mxu0 0.0
        %605 = vmatpush2.msra.mxu0 0.0
        %606 = vmatprep.subr.mxu0 0.0
        %607 = vmatpush2.msra.mxu0 0.0
        %608 = vmatprep.mubr.f32.mxu0 0.0
        %609 = vmatmul.mubr.f32.gmra.mxu0 %v539
        %v610 = vpop.f32.mrf.mxu0
        %v611 = vadd.f32 0.0, %v610
        %v612 = vpop.f32.mrf.mxu0
        %613 = vmatprep.mubr.f32.mxu0 0.0
        %614 = vmatmul.mubr.f32.gmra.mxu0 %v542
        %v615 = vpop.f32.mrf.mxu0
        %v616 = vadd.f32 0.0, %v615
        %v617 = vpop.f32.mrf.mxu0
        %618 = vdwg.mxu0
        %v619 = vadd.f32 %v533, %v611
        %v620 = vadd.f32 %v534, %v616
        %v621 = vld [vmem:[%s4] sm:$0xff]
        %v622 = vld [vmem:[%s4 + $0x8] sm:$0xff]
        %624 = vset.pattern.permute.xlu0 0
        %625 = vperm.xlu0 %624, %v621
        %v626 = vpop.permute.xlu0 %625
        %629 = vset.pattern.permute.xlu0 0
        %630 = vperm.xlu0 %629, %v622
        %v631 = vpop.permute.xlu0 %630
        %v633 = vadd.f32 %v619, %v626
        %v634 = vadd.f32 %v620, %v631
        %v635 = vtanh.pop %v633
        %v636 = vxor.u32 %v634, 2147483648
        %v637 = vmul.f32 %v636, 1.442695
        %v638 = vpow.pop %v637
        %v639 = vadd.f32 %v638, 1.0
        %v640 = vrcp.pop %v639
        %v641 = vmul.f32 1.0, %v640
        %v642 = vmul.f32 %v635, %v641
        %vm643 = vcmask 97280
        %644 = vst.msk [vmem:[%s258] sm:$0xff] %vm643, %v642
        %s645 = sand.u32 %s160, 1
        %s646 = scalar_lea.sflag [#allocation3], %s645
        %s647 = sand.u32 %s160, 1
        %s648 = smul.addr %s647, 8
        %s649 = scalar_lea.vmem [#allocation2], %s648
        // Predicated region
        $region41: #{tpu_custom_call.1} parent=39 // pred_check
          %p650 = pneg %p170
        $region42: #{tpu_custom_call.1} parent=39 // pred_check_branch
          %652 = sbr.rel (%p650) target = $region44
        $region43: #{tpu_custom_call.1} parent=39 // pred_region
          %s654 = ssub.s32 128, 128
          %655 = vsyncadd %s646, %s654
          %s656 = sadd.s32 %s24, %s23
          %s657 = smul.addr %s656, 128
          %s658 = scalar_lea.hbm %s5, %s657
          %s660 = sshll.u32 %s649, 4
          %s661 = int_to_ptr.vmem [resolvable:$true] %s660
          %663 = dma.vmem_to_hbm [thread:$0]  %s661, 128, %s658, %s646
        $region44: #{tpu_custom_call.1} parent=39 // pred_fallthru
          _
      $region40: #{tpu_custom_call.1} parent=5 // pred_fallthru
        _
      %p664 = scmp.le.s32.totalorder 2, %s14
      // Predicated region
      $region45: #{tpu_custom_call.1} parent=5 // pred_check
        %p665 = pneg %p664
      $region46: #{tpu_custom_call.1} parent=5 // pred_check_branch
        %667 = sbr.rel (%p665) target = $region48
      $region47: #{tpu_custom_call.1} parent=5 // pred_region
        %s668 = ssub.s32 %s14, 2
        // Predicated region
        $region49: #{tpu_custom_call.1} parent=47 // pred_check
          %p669 = pneg %p176
        $region50: #{tpu_custom_call.1} parent=47 // pred_check_branch
          %671 = sbr.rel (%p669) target = $region52
        $region51: #{tpu_custom_call.1} parent=47 // pred_region
          %s672 = sand.u32 %s161, 1
          %s673 = scalar_lea.sflag [#allocation3], %s672
          %s674 = sand.u32 %s161, 1
          %s675 = smul.addr %s674, 8
          %s676 = scalar_lea.vmem [#allocation2], %s675
          %677 = dma.done %s673, 128
        $region52: #{tpu_custom_call.1} parent=47 // pred_fallthru
          _
      $region48: #{tpu_custom_call.1} parent=5 // pred_fallthru
        _
    $region6: #{tpu_custom_call.1} parent=1 // loop_footer
      %s18 = sadd.s32 1, %s14
    $region7: #{tpu_custom_call.1} parent=1 // loop_footer_branch
      %13 = sbr.rel target = $region3
    $region8: #{tpu_custom_call.1} parent=1 // loop_exit
      _
    %678 = vsyncpa [#allocation3], 1
    %s679 = scalar_lea.sflag [#allocation3], 1
    %680 = vsyncpa %s679, 1

</llo_original>
